<compile_context>
chip_gen: v7x
topology: tpu7x:2x2x1
jax: 0.10.0
libtpu: 0.0.40
codegen_flags: <defaults>
</compile_context>

<pallas_src>
import functools
import math

import jax
import jax.numpy as jnp
from jax import lax
from jax.experimental import pallas as pl
from jax.experimental.pallas import tpu as pltpu


def _round_up(x: int, m: int) -> int:
    return (x + m - 1) // m * m


def _gelu(h, approximate):
    if approximate:
        return jax.nn.gelu(h, approximate=True)          # tanh -> EUP slot (fast path)
    return 0.5 * h * (1.0 + lax.erf(h * (1.0 / math.sqrt(2.0))))  # exact (nn.GELU default)


def _layer_norm_f32(x_ref, gamma_ref, beta_ref, eps):
    """Two-pass (numerically safe) LayerNorm in f32. Returns (tile_m, D) f32."""
    x = x_ref[...].astype(jnp.float32)
    mean = jnp.mean(x, axis=-1, keepdims=True)
    centered = x - mean
    var = jnp.mean(centered * centered, axis=-1, keepdims=True)
    return centered * lax.rsqrt(var + eps) * gamma_ref[...] + beta_ref[...]


def _mlp_block_kernel(x_ref, gamma_ref, beta_ref, w1_ref, b1_ref, w2_ref, b2_ref,
                      o_ref, *scratch, eps, approximate_gelu, mxu_dtype, fused):
    if fused:
        # grid_j == 1: weights fully resident — single fused pass, no scratch.
        xn = _layer_norm_f32(x_ref, gamma_ref, beta_ref, eps).astype(mxu_dtype)
        h = jnp.dot(xn, w1_ref[...], preferred_element_type=jnp.float32) + b1_ref[...]
        h = _gelu(h, approximate_gelu)
        # TODO(synk): training-mode dropout (pltpu.prng_random_bits mask) not implemented.
        # TODO(synk): optional bf16 bias-add/GELU epilogue for v6e/v7x (halves VPU work).
        out = jnp.dot(h.astype(mxu_dtype), w2_ref[...], preferred_element_type=jnp.float32)
        o_ref[...] = (out + b2_ref[...]).astype(o_ref.dtype)
        return

    # Weight-streaming path: M is tiled, second matmul accumulated in f32 scratch.
    xn_ref, acc_ref = scratch
    j = pl.program_id(1)

    @pl.when(j == 0)
    def _():
        xn_ref[...] = _layer_norm_f32(x_ref, gamma_ref, beta_ref, eps).astype(mxu_dtype)
        acc_ref[...] = jnp.zeros_like(acc_ref)

    h = jnp.dot(xn_ref[...], w1_ref[...], preferred_element_type=jnp.float32) + b1_ref[...]
    h = _gelu(h, approximate_gelu)
    acc_ref[...] += jnp.dot(h.astype(mxu_dtype), w2_ref[...],
                            preferred_element_type=jnp.float32)

    @pl.when(j == pl.num_programs(1) - 1)
    def _():
        o_ref[...] = (acc_ref[...] + b2_ref[...]).astype(o_ref.dtype)


def _vmem_budget():
    """(tile-selection budget, scoped vmem_limit_bytes), generation-aware."""
    physical = 64 << 20                         # conservative default (v7x per-TC)
    try:
        info = pltpu.get_tpu_info()
        physical = int(getattr(info, "vmem_capacity_bytes", physical)) or physical
    except Exception:
        pass
    budget = min(int(0.75 * physical), 92 << 20)        # tile selection budget
    vmem_limit = min(int(0.85 * physical), 100 << 20)   # limit handed to Mosaic
    return budget, vmem_limit


def _vmem_usage(tile_m, tile_n, D, M, x_bytes, mxu_bytes):
    """Estimated VMEM bytes for one pipelined step with this tiling."""
    resident = tile_n == M
    use = 2 * tile_m * D * x_bytes                              # x token tile (2 buffers)
    use += 2 * tile_m * D * x_bytes                             # output tile (2 buffers)
    use += 3 * D * 4                                            # gamma/beta/b2 (1 buffer)
    use += tile_n * 4 * (1 if resident else 2)                  # b1 slice
    use += 2 * D * tile_n * mxu_bytes * (1 if resident else 2)  # W1 + W2 slices
    if not resident:
        use += tile_m * D * (mxu_bytes + 4)                     # xn cache + f32 accumulator
    use += tile_m * tile_n * (4 + mxu_bytes)                    # f32 GELU tile + mxu cast
    use += tile_m * D * 4                                       # LN f32 temporaries / headroom
    return use


def _choose_tiles(N, D, M, x_bytes, mxu_bytes, budget, tile_m, tile_n):
    # --- token-tile (parallel axis) candidates ---
    if tile_m is not None:
        tms = [tile_m]
    elif N <= 512:
        # Keep >= 2 token tiles so both v7x TensorCores get work / pipelining overlaps.
        tms = [max(8, _round_up(pl.cdiv(N, 2), 8))]
    else:
        max_tm = max(128, _round_up(pl.cdiv(N, 2), 8))
        tms = [t for t in (1024, 512, 256, 128) if t <= max_tm] or [128]

    # --- MLP-hidden (reduction axis) candidates; M first => weights fully resident ---
    if tile_n is not None:
        tns = [tile_n]
    else:
        tns = [M] + [c for c in (4096, 2048, 1024, 512, 256, 128) if c < M and M % c == 0]

    # Pass 1: weights fully resident (biggest HBM-traffic win: W1/W2 streamed once).
    if M in tns:
        for tm in tms:
            if _vmem_usage(tm, M, D, M, x_bytes, mxu_bytes) <= budget:
                return tm, M
    # Pass 2: weight streaming — big token tile first (arithmetic intensity), then the
    # largest weight slice that fits the budget.
    for tm in tms:
        for tn in tns:
            if _vmem_usage(tm, tn, D, M, x_bytes, mxu_bytes) <= budget:
                return tm, tn
    return tms[-1], tns[-1]


def mlp_block(x, gamma, beta, w1, b1, w2, b2, *,
              eps=1e-5, tile_m=None, tile_n=None,
              mxu_dtype=None, approximate_gelu=False):
    """Fused LayerNorm -> Linear(D,M) -> GELU -> Linear(M,D). x: (..., D)."""
    orig_shape = x.shape
    D = orig_shape[-1]
    M = w1.shape[1]
    N = 1
    for d in orig_shape[:-1]:
        N *= d
    xf = x.reshape(N, D)

    # MXU compute dtype: bf16 whenever activations or weights are bf16, else f32.
    if mxu_dtype is None:
        mxu_dtype = jnp.bfloat16 if (x.dtype == jnp.bfloat16 or
                                     w1.dtype == jnp.bfloat16) else jnp.float32
    # TODO(synk): v7x fp8 weight path (per-channel scales folded into the f32
    # accumulator) not implemented.
    mxu_bytes = jnp.dtype(mxu_dtype).itemsize
    x_bytes = jnp.dtype(x.dtype).itemsize

    budget, vmem_limit = _vmem_budget()
    tile_m, tile_n = _choose_tiles(N, D, M, x_bytes, mxu_bytes, budget, tile_m, tile_n)
    assert M % tile_n == 0, "mlp hidden size must be divisible by tile_n"

    N_pad = _round_up(max(N, tile_m), tile_m)
    if N_pad != N:
        xf = jnp.pad(xf, ((0, N_pad - N), (0, 0)))          # ragged-tail handling

    grid_i = N_pad // tile_m
    grid_j = M // tile_n
    resident = grid_j == 1        # weights fully resident -> fused single-pass kernel

    # Weights in the MXU dtype; biases / LN affine stay f32 (added on the f32 side).
    w1c = w1.astype(mxu_dtype)
    w2c = w2.astype(mxu_dtype)
    b1_2d = b1.reshape(1, M).astype(jnp.float32)
    b2_2d = b2.reshape(1, D).astype(jnp.float32)
    gamma_2d = gamma.reshape(1, D).astype(jnp.float32)
    beta_2d = beta.reshape(1, D).astype(jnp.float32)

    kernel = functools.partial(_mlp_block_kernel, eps=eps,
                               approximate_gelu=approximate_gelu,
                               mxu_dtype=mxu_dtype, fused=resident)

    scratch_shapes = [] if resident else [
        pltpu.VMEM((tile_m, D), mxu_dtype),    # cached LayerNorm output
        pltpu.VMEM((tile_m, D), jnp.float32),  # f32 output accumulator
    ]

    cost = pl.CostEstimate(
        flops=4 * N_pad * D * M + 8 * N_pad * D,
        transcendentals=N_pad * M,
        bytes_accessed=(2 * N_pad * D * x_bytes                               # x in + out
                        + (1 if resident else grid_i) * 2 * D * M * mxu_bytes  # streamed W
                        + (M + 3 * D) * 4))                                    # biases + LN

    out_shape = jax.ShapeDtypeStruct((N_pad, D), x.dtype)

    def build_and_run(single_buffer_ok):
        def spec(shape, index_map, single=False):
            if single and single_buffer_ok:
                return pl.BlockSpec(shape, index_map, pipeline_mode=pl.Buffered(1))
            return pl.BlockSpec(shape, index_map)

        in_specs = [
            spec((tile_m, D), lambda i, j: (i, 0)),                   # x token tile
            spec((1, D), lambda i, j: (0, 0), single=True),           # gamma
            spec((1, D), lambda i, j: (0, 0), single=True),           # beta
            spec((D, tile_n), lambda i, j: (0, j), single=resident),  # W1 slice
            spec((1, tile_n), lambda i, j: (0, j), single=resident),  # b1 slice
            spec((tile_n, D), lambda i, j: (j, 0), single=resident),  # W2 slice
            spec((1, D), lambda i, j: (0, 0), single=True),           # b2
        ]
        out_spec = pl.BlockSpec((tile_m, D), lambda i, j: (i, 0))

        fn = pl.pallas_call(
            kernel,
            out_shape=out_shape,
            grid_spec=pltpu.PrefetchScalarGridSpec(
                num_scalar_prefetch=0,
                grid=(grid_i, grid_j),
                in_specs=in_specs,
                out_specs=out_spec,
                scratch_shapes=scratch_shapes),
            compiler_params=pltpu.CompilerParams(
                # NOTE(v7x): "parallel" lets Mosaic shard the token axis across both
                # TensorCores; switch to pltpu.CORE_PARALLEL if profiling shows one
                # core idle.
                dimension_semantics=("parallel", "arbitrary"),
                vmem_limit_bytes=vmem_limit),
            cost_estimate=cost,
        )
        return fn(xf, gamma_2d, beta_2d, w1c, b1_2d, w2c, b2_2d)

    # Single-buffer constant-index blocks when supported; fall back to default
    # double buffering if this jax version rejects pipeline_mode / Buffered(1).
    try:
        out = build_and_run(True)
    except Exception:
        out = build_and_run(False)

    if N_pad != N:
        out = out[:N]
    return out.reshape(orig_shape)


def _reference(x, gamma, beta, w1, b1, w2, b2, eps=1e-5):
    xf = x.astype(jnp.float32)
    mean = jnp.mean(xf, axis=-1, keepdims=True)
    var = jnp.mean((xf - mean) ** 2, axis=-1, keepdims=True)
    xn = (xf - mean) * lax.rsqrt(var + eps) * gamma + beta
    h = xn @ w1.astype(jnp.float32) + b1
    h = 0.5 * h * (1.0 + lax.erf(h / math.sqrt(2.0)))
    return h @ w2.astype(jnp.float32) + b2


if __name__ == "__main__":
    # Small shapes consistent with the module: embedding_dim=128, mlp_size=256.
    B, S, D, M = 2, 8, 128, 256
    key = jax.random.PRNGKey(0)
    kx, kw1, kb1, kw2, kb2 = jax.random.split(key, 5)

    x = jax.random.normal(kx, (B, S, D), dtype=jnp.float32)
    gamma = jnp.ones((D,), jnp.float32)
    beta = jnp.zeros((D,), jnp.float32)
    w1 = jax.random.normal(kw1, (D, M), dtype=jnp.float32) * 0.02
    b1 = jax.random.normal(kb1, (M,), dtype=jnp.float32) * 0.01
    w2 = jax.random.normal(kw2, (M, D), dtype=jnp.float32) * 0.02
    b2 = jax.random.normal(kb2, (D,), dtype=jnp.float32) * 0.01

    y_ref = _reference(x, gamma, beta, w1, b1, w2, b2)

    # 1) f32, weights-resident fused path (grid_j == 1), exact erf GELU.
    y = mlp_block(x, gamma, beta, w1, b1, w2, b2)
    jax.block_until_ready(y)
    assert y.shape == (B, S, D)
    assert jnp.allclose(y, y_ref, atol=2e-4, rtol=2e-4), "f32 fused path mismatch"

    # 2) f32, forced weight-streaming path (tile_n < M exercises the accumulator).
    y_s = mlp_block(x, gamma, beta, w1, b1, w2, b2, tile_n=128)
    jax.block_until_ready(y_s)
    assert jnp.allclose(y_s, y_ref, atol=2e-4, rtol=2e-4), "f32 streaming path mismatch"

    # 3) bf16 MXU path + tanh (EUP) GELU, checked loosely against an f32 reference
    #    built from the same bf16-rounded inputs.
    xb = x.astype(jnp.bfloat16)
    w1b = w1.astype(jnp.bfloat16)
    w2b = w2.astype(jnp.bfloat16)
    yb = mlp_block(xb, gamma, beta, w1b, b1, w2b, b2, approximate_gelu=True)
    jax.block_until_ready(yb)
    yb_ref = _reference(xb.astype(jnp.float32), gamma, beta,
                        w1b.astype(jnp.float32), b1,
                        w2b.astype(jnp.float32), b2)
    assert jnp.allclose(yb.astype(jnp.float32), yb_ref, atol=5e-2, rtol=5e-2), \
        "bf16 path mismatch"

    print("KERNEL_OK")
</pallas_src>

<mosaic_0001>
module attributes {stable_mosaic.version = 11 : i64} {
  func.func @_mlp_block_kernel(%arg0: i32, %arg1: i32, %arg2: memref<8x128xf32, #tpu.memory_space<vmem>>, %arg3: memref<1x128xf32, #tpu.memory_space<vmem>>, %arg4: memref<1x128xf32, #tpu.memory_space<vmem>>, %arg5: memref<128x256xf32, #tpu.memory_space<vmem>>, %arg6: memref<1x256xf32, #tpu.memory_space<vmem>>, %arg7: memref<256x128xf32, #tpu.memory_space<vmem>>, %arg8: memref<1x128xf32, #tpu.memory_space<vmem>>, %arg9: memref<8x128xf32, #tpu.memory_space<vmem>>) attributes {dimension_semantics = [#tpu.dimension_semantics<parallel>, #tpu.dimension_semantics<arbitrary>], iteration_bounds = array<i64: 2, 1>, scalar_prefetch = 0 : i64, scratch_operands = 0 : i64, tpu.core_type = #tpu.core_type<tc>, window_params = [{transform_indices = @transform_0, window_bounds = array<i64: 8, 128>}, {pipeline_mode = #tpu.pipeline_mode<synchronous>, transform_indices = @transform_1, window_bounds = array<i64: 1, 128>}, {pipeline_mode = #tpu.pipeline_mode<synchronous>, transform_indices = @transform_2, window_bounds = array<i64: 1, 128>}, {pipeline_mode = #tpu.pipeline_mode<synchronous>, transform_indices = @transform_3, window_bounds = array<i64: 128, 256>}, {pipeline_mode = #tpu.pipeline_mode<synchronous>, transform_indices = @transform_4, window_bounds = array<i64: 1, 256>}, {pipeline_mode = #tpu.pipeline_mode<synchronous>, transform_indices = @transform_5, window_bounds = array<i64: 256, 128>}, {pipeline_mode = #tpu.pipeline_mode<synchronous>, transform_indices = @transform_6, window_bounds = array<i64: 1, 128>}, {transform_indices = @transform_7, window_bounds = array<i64: 8, 128>}]} {
    %c0 = arith.constant 0 : index
    %c0_0 = arith.constant 0 : index
    %0 = vector.load %arg2[%c0, %c0_0] : memref<8x128xf32, #tpu.memory_space<vmem>>, vector<8x128xf32>
    %cst = arith.constant dense<0.000000e+00> : vector<8xf32>
    %1 = vector.multi_reduction <add>, %0, %cst [1] : vector<8x128xf32> to vector<8xf32>
    %2 = vector.shape_cast %1 : vector<8xf32> to vector<8x1xf32>
    %cst_1 = arith.constant 1.280000e+02 : f32
    %3 = vector.broadcast %cst_1 : f32 to vector<8x1xf32>
    %4 = arith.divf %2, %3 : vector<8x1xf32>
    %5 = vector.broadcast %4 : vector<8x1xf32> to vector<8x128xf32>
    %6 = arith.subf %0, %5 : vector<8x128xf32>
    %7 = arith.mulf %6, %6 : vector<8x128xf32>
    %cst_2 = arith.constant dense<0.000000e+00> : vector<8xf32>
    %8 = vector.multi_reduction <add>, %7, %cst_2 [1] : vector<8x128xf32> to vector<8xf32>
    %9 = vector.shape_cast %8 : vector<8xf32> to vector<8x1xf32>
    %cst_3 = arith.constant 1.280000e+02 : f32
    %10 = vector.broadcast %cst_3 : f32 to vector<8x1xf32>
    %11 = arith.divf %9, %10 : vector<8x1xf32>
    %cst_4 = arith.constant 9.99999974E-6 : f32
    %12 = vector.broadcast %cst_4 : f32 to vector<8x1xf32>
    %13 = arith.addf %11, %12 : vector<8x1xf32>
    %14 = math.rsqrt %13 : vector<8x1xf32>
    %15 = vector.broadcast %14 : vector<8x1xf32> to vector<8x128xf32>
    %16 = arith.mulf %6, %15 : vector<8x128xf32>
    %c0_5 = arith.constant 0 : index
    %c0_6 = arith.constant 0 : index
    %17 = vector.load %arg3[%c0_5, %c0_6] : memref<1x128xf32, #tpu.memory_space<vmem>>, vector<1x128xf32>
    %18 = vector.broadcast %17 : vector<1x128xf32> to vector<8x128xf32>
    %19 = arith.mulf %16, %18 : vector<8x128xf32>
    %c0_7 = arith.constant 0 : index
    %c0_8 = arith.constant 0 : index
    %20 = vector.load %arg4[%c0_7, %c0_8] : memref<1x128xf32, #tpu.memory_space<vmem>>, vector<1x128xf32>
    %21 = vector.broadcast %20 : vector<1x128xf32> to vector<8x128xf32>
    %22 = arith.addf %19, %21 : vector<8x128xf32>
    %c0_9 = arith.constant 0 : index
    %c0_10 = arith.constant 0 : index
    %23 = vector.load %arg5[%c0_9, %c0_10] : memref<128x256xf32, #tpu.memory_space<vmem>>, vector<128x256xf32>
    %cst_11 = arith.constant dense<0.000000e+00> : vector<8x256xf32>
    %24 = tpu.matmul %22, %23, %cst_11 {dimension_numbers = #tpu.dot_dimension_numbers<[1], [0], [0], [1], [0, 0, 1, 1], [], []>} : vector<8x128xf32>, vector<128x256xf32>, vector<8x256xf32> -> vector<8x256xf32>
    %c0_12 = arith.constant 0 : index
    %c0_13 = arith.constant 0 : index
    %25 = vector.load %arg6[%c0_12, %c0_13] : memref<1x256xf32, #tpu.memory_space<vmem>>, vector<1x256xf32>
    %26 = vector.broadcast %25 : vector<1x256xf32> to vector<8x256xf32>
    %27 = arith.addf %24, %26 : vector<8x256xf32>
    %cst_14 = arith.constant 5.000000e-01 : f32
    %28 = vector.broadcast %cst_14 : f32 to vector<8x256xf32>
    %29 = arith.mulf %28, %27 : vector<8x256xf32>
    %cst_15 = arith.constant 0.707106769 : f32
    %30 = vector.broadcast %cst_15 : f32 to vector<8x256xf32>
    %31 = arith.mulf %27, %30 : vector<8x256xf32>
    %32 = math.erf %31 : vector<8x256xf32>
    %cst_16 = arith.constant 1.000000e+00 : f32
    %33 = vector.broadcast %cst_16 : f32 to vector<8x256xf32>
    %34 = arith.addf %33, %32 : vector<8x256xf32>
    %35 = arith.mulf %29, %34 : vector<8x256xf32>
    %c0_17 = arith.constant 0 : index
    %c0_18 = arith.constant 0 : index
    %36 = vector.load %arg7[%c0_17, %c0_18] : memref<256x128xf32, #tpu.memory_space<vmem>>, vector<256x128xf32>
    %cst_19 = arith.constant dense<0.000000e+00> : vector<8x128xf32>
    %37 = tpu.matmul %35, %36, %cst_19 {dimension_numbers = #tpu.dot_dimension_numbers<[1], [0], [0], [1], [0, 0, 1, 1], [], []>} : vector<8x256xf32>, vector<256x128xf32>, vector<8x128xf32> -> vector<8x128xf32>
    %c0_20 = arith.constant 0 : index
    %c0_21 = arith.constant 0 : index
    %38 = vector.load %arg8[%c0_20, %c0_21] : memref<1x128xf32, #tpu.memory_space<vmem>>, vector<1x128xf32>
    %39 = vector.broadcast %38 : vector<1x128xf32> to vector<8x128xf32>
    %40 = arith.addf %37, %39 : vector<8x128xf32>
    %c0_22 = arith.constant 0 : index
    %c0_23 = arith.constant 0 : index
    %41 = vector.load %arg9[%c0_22, %c0_23] : memref<8x128xf32, #tpu.memory_space<vmem>>, vector<8x128xf32>
    tpu.vector_store %arg9[%c0_22, %c0_23], %40 {strides = array<i32>} : memref<8x128xf32, #tpu.memory_space<vmem>>, vector<8x128xf32>,
    return
  }
  func.func @transform_0(%arg0: i32, %arg1: i32) -> (i32, i32) {
    %c0_i32 = arith.constant 0 : i32
    %c0_i32_0 = arith.constant 0 : i32
    return %arg0, %c0_i32 : i32, i32
  }
  func.func @transform_1(%arg0: i32, %arg1: i32) -> (i32, i32) {
    %c0_i32 = arith.constant 0 : i32
    %c0_i32_0 = arith.constant 0 : i32
    %c0_i32_1 = arith.constant 0 : i32
    return %c0_i32, %c0_i32_0 : i32, i32
  }
  func.func @transform_2(%arg0: i32, %arg1: i32) -> (i32, i32) {
    %c0_i32 = arith.constant 0 : i32
    %c0_i32_0 = arith.constant 0 : i32
    %c0_i32_1 = arith.constant 0 : i32
    return %c0_i32, %c0_i32_0 : i32, i32
  }
  func.func @transform_3(%arg0: i32, %arg1: i32) -> (i32, i32) {
    %c0_i32 = arith.constant 0 : i32
    %c0_i32_0 = arith.constant 0 : i32
    return %c0_i32, %arg1 : i32, i32
  }
  func.func @transform_4(%arg0: i32, %arg1: i32) -> (i32, i32) {
    %c0_i32 = arith.constant 0 : i32
    %c0_i32_0 = arith.constant 0 : i32
    return %c0_i32, %arg1 : i32, i32
  }
  func.func @transform_5(%arg0: i32, %arg1: i32) -> (i32, i32) {
    %c0_i32 = arith.constant 0 : i32
    %c0_i32_0 = arith.constant 0 : i32
    return %arg1, %c0_i32 : i32, i32
  }
  func.func @transform_6(%arg0: i32, %arg1: i32) -> (i32, i32) {
    %c0_i32 = arith.constant 0 : i32
    %c0_i32_0 = arith.constant 0 : i32
    %c0_i32_1 = arith.constant 0 : i32
    return %c0_i32, %c0_i32_0 : i32, i32
  }
  func.func @transform_7(%arg0: i32, %arg1: i32) -> (i32, i32) {
    %c0_i32 = arith.constant 0 : i32
    %c0_i32_0 = arith.constant 0 : i32
    return %arg0, %c0_i32 : i32, i32
  }
}

module attributes {stable_mosaic.version = 11 : i64} {
  func.func @_mlp_block_kernel(%arg0: i32, %arg1: i32, %arg2: memref<8x128xf32, #tpu.memory_space<vmem>>, %arg3: memref<1x128xf32, #tpu.memory_space<vmem>>, %arg4: memref<1x128xf32, #tpu.memory_space<vmem>>, %arg5: memref<128x256xf32, #tpu.memory_space<vmem>>, %arg6: memref<1x256xf32, #tpu.memory_space<vmem>>, %arg7: memref<256x128xf32, #tpu.memory_space<vmem>>, %arg8: memref<1x128xf32, #tpu.memory_space<vmem>>, %arg9: memref<8x128xf32, #tpu.memory_space<vmem>>) attributes {dimension_semantics = [#tpu.dimension_semantics<parallel>, #tpu.dimension_semantics<arbitrary>], iteration_bounds = array<i64: 2, 1>, scalar_prefetch = 0 : i64, scratch_operands = 0 : i64, tpu.core_type = #tpu.core_type<tc>, window_params = [{transform_indices = @transform_0, window_bounds = array<i64: 8, 128>}, {pipeline_mode = #tpu.pipeline_mode<synchronous>, transform_indices = @transform_1, window_bounds = array<i64: 1, 128>}, {pipeline_mode = #tpu.pipeline_mode<synchronous>, transform_indices = @transform_2, window_bounds = array<i64: 1, 128>}, {transform_indices = @transform_3, window_bounds = array<i64: 128, 256>}, {transform_indices = @transform_4, window_bounds = array<i64: 1, 256>}, {transform_indices = @transform_5, window_bounds = array<i64: 256, 128>}, {pipeline_mode = #tpu.pipeline_mode<synchronous>, transform_indices = @transform_6, window_bounds = array<i64: 1, 128>}, {transform_indices = @transform_7, window_bounds = array<i64: 8, 128>}]} {
    %c0 = arith.constant 0 : index
    %c0_0 = arith.constant 0 : index
    %0 = vector.load %arg2[%c0, %c0_0] : memref<8x128xf32, #tpu.memory_space<vmem>>, vector<8x128xf32>
    %cst = arith.constant dense<0.000000e+00> : vector<8xf32>
    %1 = vector.multi_reduction <add>, %0, %cst [1] : vector<8x128xf32> to vector<8xf32>
    %2 = vector.shape_cast %1 : vector<8xf32> to vector<8x1xf32>
    %cst_1 = arith.constant 1.280000e+02 : f32
    %3 = vector.broadcast %cst_1 : f32 to vector<8x1xf32>
    %4 = arith.divf %2, %3 : vector<8x1xf32>
    %5 = vector.broadcast %4 : vector<8x1xf32> to vector<8x128xf32>
    %6 = arith.subf %0, %5 : vector<8x128xf32>
    %7 = arith.mulf %6, %6 : vector<8x128xf32>
    %cst_2 = arith.constant dense<0.000000e+00> : vector<8xf32>
    %8 = vector.multi_reduction <add>, %7, %cst_2 [1] : vector<8x128xf32> to vector<8xf32>
    %9 = vector.shape_cast %8 : vector<8xf32> to vector<8x1xf32>
    %cst_3 = arith.constant 1.280000e+02 : f32
    %10 = vector.broadcast %cst_3 : f32 to vector<8x1xf32>
    %11 = arith.divf %9, %10 : vector<8x1xf32>
    %cst_4 = arith.constant 9.99999974E-6 : f32
    %12 = vector.broadcast %cst_4 : f32 to vector<8x1xf32>
    %13 = arith.addf %11, %12 : vector<8x1xf32>
    %14 = math.rsqrt %13 : vector<8x1xf32>
    %15 = vector.broadcast %14 : vector<8x1xf32> to vector<8x128xf32>
    %16 = arith.mulf %6, %15 : vector<8x128xf32>
    %c0_5 = arith.constant 0 : index
    %c0_6 = arith.constant 0 : index
    %17 = vector.load %arg3[%c0_5, %c0_6] : memref<1x128xf32, #tpu.memory_space<vmem>>, vector<1x128xf32>
    %18 = vector.broadcast %17 : vector<1x128xf32> to vector<8x128xf32>
    %19 = arith.mulf %16, %18 : vector<8x128xf32>
    %c0_7 = arith.constant 0 : index
    %c0_8 = arith.constant 0 : index
    %20 = vector.load %arg4[%c0_7, %c0_8] : memref<1x128xf32, #tpu.memory_space<vmem>>, vector<1x128xf32>
    %21 = vector.broadcast %20 : vector<1x128xf32> to vector<8x128xf32>
    %22 = arith.addf %19, %21 : vector<8x128xf32>
    %c0_9 = arith.constant 0 : index
    %c0_10 = arith.constant 0 : index
    %23 = vector.load %arg5[%c0_9, %c0_10] : memref<128x256xf32, #tpu.memory_space<vmem>>, vector<128x256xf32>
    %cst_11 = arith.constant dense<0.000000e+00> : vector<8x256xf32>
    %24 = tpu.matmul %22, %23, %cst_11 {dimension_numbers = #tpu.dot_dimension_numbers<[1], [0], [0], [1], [0, 0, 1, 1], [], []>} : vector<8x128xf32>, vector<128x256xf32>, vector<8x256xf32> -> vector<8x256xf32>
    %c0_12 = arith.constant 0 : index
    %c0_13 = arith.constant 0 : index
    %25 = vector.load %arg6[%c0_12, %c0_13] : memref<1x256xf32, #tpu.memory_space<vmem>>, vector<1x256xf32>
    %26 = vector.broadcast %25 : vector<1x256xf32> to vector<8x256xf32>
    %27 = arith.addf %24, %26 : vector<8x256xf32>
    %cst_14 = arith.constant 5.000000e-01 : f32
    %28 = vector.broadcast %cst_14 : f32 to vector<8x256xf32>
    %29 = arith.mulf %28, %27 : vector<8x256xf32>
    %cst_15 = arith.constant 0.707106769 : f32
    %30 = vector.broadcast %cst_15 : f32 to vector<8x256xf32>
    %31 = arith.mulf %27, %30 : vector<8x256xf32>
    %32 = math.erf %31 : vector<8x256xf32>
    %cst_16 = arith.constant 1.000000e+00 : f32
    %33 = vector.broadcast %cst_16 : f32 to vector<8x256xf32>
    %34 = arith.addf %33, %32 : vector<8x256xf32>
    %35 = arith.mulf %29, %34 : vector<8x256xf32>
    %c0_17 = arith.constant 0 : index
    %c0_18 = arith.constant 0 : index
    %36 = vector.load %arg7[%c0_17, %c0_18] : memref<256x128xf32, #tpu.memory_space<vmem>>, vector<256x128xf32>
    %cst_19 = arith.constant dense<0.000000e+00> : vector<8x128xf32>
    %37 = tpu.matmul %35, %36, %cst_19 {dimension_numbers = #tpu.dot_dimension_numbers<[1], [0], [0], [1], [0, 0, 1, 1], [], []>} : vector<8x256xf32>, vector<256x128xf32>, vector<8x128xf32> -> vector<8x128xf32>
    %c0_20 = arith.constant 0 : index
    %c0_21 = arith.constant 0 : index
    %38 = vector.load %arg8[%c0_20, %c0_21] : memref<1x128xf32, #tpu.memory_space<vmem>>, vector<1x128xf32>
    %39 = vector.broadcast %38 : vector<1x128xf32> to vector<8x128xf32>
    %40 = arith.addf %37, %39 : vector<8x128xf32>
    %c0_22 = arith.constant 0 : index
    %c0_23 = arith.constant 0 : index
    %41 = vector.load %arg9[%c0_22, %c0_23] : memref<8x128xf32, #tpu.memory_space<vmem>>, vector<8x128xf32>
    tpu.vector_store %arg9[%c0_22, %c0_23], %40 {strides = array<i32>} : memref<8x128xf32, #tpu.memory_space<vmem>>, vector<8x128xf32>,
    return
  }
  func.func @transform_0(%arg0: i32, %arg1: i32) -> (i32, i32) {
    %c0_i32 = arith.constant 0 : i32
    %c0_i32_0 = arith.constant 0 : i32
    return %arg0, %c0_i32 : i32, i32
  }
  func.func @transform_1(%arg0: i32, %arg1: i32) -> (i32, i32) {
    %c0_i32 = arith.constant 0 : i32
    %c0_i32_0 = arith.constant 0 : i32
    %c0_i32_1 = arith.constant 0 : i32
    return %c0_i32, %c0_i32_0 : i32, i32
  }
  func.func @transform_2(%arg0: i32, %arg1: i32) -> (i32, i32) {
    %c0_i32 = arith.constant 0 : i32
    %c0_i32_0 = arith.constant 0 : i32
    %c0_i32_1 = arith.constant 0 : i32
    return %c0_i32, %c0_i32_0 : i32, i32
  }
  func.func @transform_3(%arg0: i32, %arg1: i32) -> (i32, i32) {
    %c0_i32 = arith.constant 0 : i32
    %c0_i32_0 = arith.constant 0 : i32
    return %c0_i32, %arg1 : i32, i32
  }
  func.func @transform_4(%arg0: i32, %arg1: i32) -> (i32, i32) {
    %c0_i32 = arith.constant 0 : i32
    %c0_i32_0 = arith.constant 0 : i32
    return %c0_i32, %arg1 : i32, i32
  }
  func.func @transform_5(%arg0: i32, %arg1: i32) -> (i32, i32) {
    %c0_i32 = arith.constant 0 : i32
    %c0_i32_0 = arith.constant 0 : i32
    return %arg1, %c0_i32 : i32, i32
  }
  func.func @transform_6(%arg0: i32, %arg1: i32) -> (i32, i32) {
    %c0_i32 = arith.constant 0 : i32
    %c0_i32_0 = arith.constant 0 : i32
    %c0_i32_1 = arith.constant 0 : i32
    return %c0_i32, %c0_i32_0 : i32, i32
  }
  func.func @transform_7(%arg0: i32, %arg1: i32) -> (i32, i32) {
    %c0_i32 = arith.constant 0 : i32
    %c0_i32_0 = arith.constant 0 : i32
    return %arg0, %c0_i32 : i32, i32
  }
}

</mosaic_0001>

<llo_original>
// kernel: tpu_custom_call.1
$region0: #{tpu_custom_call.1}
  #allocation0 [shape = 'u32[]', space=smem, size = 0x4, offset = 0x4, fixed_abs, tag = 'smem constant byte address 0x4 - core index']
  #allocation1 [shape = 'u32[144,128]{1,0:T(1,128)}', space=vmem, size = 0x12000, scoped, tag = 'internal scratch']
  %s0 = inlined_call_operand.hbm [shape: f32[16,128], index: 0, kind: input, shape index: {}]
  %s1 = inlined_call_operand.vmem [shape: f32[1,128], index: 1, kind: input, shape index: {}]
  %s2 = inlined_call_operand.vmem [shape: f32[1,128], index: 2, kind: input, shape index: {}]
  %s3 = inlined_call_operand.hbm [shape: f32[128,256], index: 3, kind: input, shape index: {}]
  %s4 = inlined_call_operand.vmem [shape: f32[1,256], index: 4, kind: input, shape index: {}]
  %s5 = inlined_call_operand.hbm [shape: f32[256,128], index: 5, kind: input, shape index: {}]
  %s6 = inlined_call_operand.vmem [shape: f32[1,128], index: 6, kind: input, shape index: {}]
  %s7 = inlined_call_operand.hbm [shape: f32[16,128], index: 7, kind: output, shape index: {}]
  %s8 = sld [smem:[#allocation0]]
  $region73: #{tpu_custom_call.1} parent=0
    _
  %s10 = ssub.s32 1, %s8
  %s11 = scalar_select 0, %s10, %s8
  $region1: #{tpu_custom_call.1} parent=0
    #allocation2 [shape = 'u8[8192]{0}', space=vmem, size = 0x2000, scoped, tag = 'input window, operand 0']
    #allocation3 [shape = 's32[2]{0}', space=sflag, size = 0x8, scoped, tag = 'scoped memory for tpu_custom_call.1']
    #allocation4 [shape = 's32[2]{0}', space=sflag, size = 0x8, scoped, tag = 'scoped memory for tpu_custom_call.1']
    #allocation5 [shape = 'u8[131072]{0}', space=vmem, size = 0x20000, scoped, tag = 'input window, operand 3, single buffered']
    #allocation6 [shape = 's32[1]{0}', space=sflag, size = 0x4, scoped, tag = 'scoped memory for tpu_custom_call.1']
    #allocation7 [shape = 'u8[131072]{0}', space=vmem, size = 0x20000, scoped, tag = 'input window, operand 5, single buffered']
    #allocation8 [shape = 'u8[8192]{0}', space=vmem, size = 0x2000, scoped, tag = 'output window, operand 0']
    %12 = vsyncpa [#allocation3], 0
    %s13 = scalar_lea.sflag [#allocation3], 1
    %14 = vsyncpa %s13, 0
    %15 = vsyncpa [#allocation6], 0
    %16 = vsyncpa [#allocation4], 0
    %s17 = scalar_lea.sflag [#allocation4], 1
    %18 = vsyncpa %s17, 0
    loop: start=0, step=1, limit=4
    $region2: #{tpu_custom_call.1} parent=1 // loop_pre_header
      _
    $region3: #{tpu_custom_call.1} parent=1 // loop_header
      %s20 = sphi 0, %s24
      %p21 = scmp.ge.s32.totalorder %s20, 4
      %s27 = sphi 0, %s39
      %s28 = sphi 0, %s35
      %s29 = sphi 0, %s27
      %s30 = sphi 0, %s28
      %s31 = sphi 0, %s29
      %s32 = sphi 0, %s30
      %s42 = sphi 0, %s44
      %s45 = sphi 0, %s42
      %s46 = sphi 0, %s45
      %s62 = sphi 0, %s46
      %s66 = sphi 0, %s66
      %s68 = sphi 0, %s66
      %s69 = sphi 0, %s68
      %s83 = sphi 0, %s69
      %s87 = sphi 0, %s87
      %s89 = sphi 0, %s87
      %s90 = sphi 0, %s89
      %s104 = sphi 0, %s90
      %s110 = sphi 0, %s112
      %s113 = sphi 0, %s110
      %s114 = sphi 0, %s113
      %s130 = sphi 0, %s114
      %s136 = sphi 0, %s138
      %s139 = sphi 0, %s136
      %s140 = sphi 0, %s139
      %s156 = sphi 0, %s140
      %s162 = sphi 0, %s164
      %s165 = sphi 0, %s162
      %s166 = sphi 0, %s165
      %s182 = sphi 0, %s166
      %s186 = sphi 0, %s186
      %s188 = sphi 0, %s186
      %s189 = sphi 0, %s188
      %s203 = sphi 0, %s189
      %s209 = sphi 0, %s211
      %s212 = sphi 0, %s209
      %s213 = sphi 0, %s212
      %s229 = sphi 0, %s213
    $region4: #{tpu_custom_call.1} parent=1 // loop_header_branch
      %23 = sbr.rel (%p21) target = $region8
    $region5: #{tpu_custom_call.1} parent=1 // loop_body
      %s25 = ssub.s32 %s20, 1
      %s26 = ssub.s32 %s20, 2
      %s33 = sadd.s32 1, %s28
      %p34 = scmp.ge.s32.totalorder %s33, 1
      %s35 = scalar_select %p34, 0, %s33
      %s36 = sadd.s32 1, %s27
      %s37 = scalar_select %p34, %s36, %s27
      %p38 = scmp.ge.s32.totalorder %s37, 2
      %s39 = scalar_select %p38, 0, %s37
      %s40 = ssub.s32 %s27, %s39
      %p41 = scmp.eq.s32.totalorder %s40, 0
      %s43 = sadd.s32 %s42, 1
      %s44 = scalar_select %p41, %s42, %s43
      %p47 = pneg %p41
      %p48 = scmp.eq.s32.totalorder %s20, 1
      %p49 = por %p47, %p48
      %p50 = scmp.ne.s32.totalorder %s42, %s45
      %p51 = scmp.eq.s32.totalorder %s20, 0
      %p52 = por %p50, %p51
      %p53 = scmp.ne.s32.totalorder %s42, %s45
      %p54 = scmp.eq.s32.totalorder %s25, 1
      %p55 = por %p53, %p54
      %p56 = scmp.ne.s32.totalorder %s45, %s46
      %p57 = scmp.eq.s32.totalorder %s25, 0
      %p58 = por %p56, %p57
      %p59 = scmp.ne.s32.totalorder %s45, %s46
      %p60 = scmp.eq.s32.totalorder %s26, 1
      %p61 = por %p59, %p60
      %p63 = scmp.ne.s32.totalorder %s46, %s62
      %p64 = scmp.eq.s32.totalorder %s26, 0
      %p65 = por %p63, %p64
      %s67 = sadd.s32 %s66, 1
      %p70 = scmp.eq.s32.totalorder %s20, 1
      %p71 = scmp.ne.s32.totalorder %s66, %s68
      %p72 = scmp.eq.s32.totalorder %s20, 0
      %p73 = por %p71, %p72
      %p74 = scmp.ne.s32.totalorder %s66, %s68
      %p75 = scmp.eq.s32.totalorder %s25, 1
      %p76 = por %p74, %p75
      %p77 = scmp.ne.s32.totalorder %s68, %s69
      %p78 = scmp.eq.s32.totalorder %s25, 0
      %p79 = por %p77, %p78
      %p80 = scmp.ne.s32.totalorder %s68, %s69
      %p81 = scmp.eq.s32.totalorder %s26, 1
      %p82 = por %p80, %p81
      %p84 = scmp.ne.s32.totalorder %s69, %s83
      %p85 = scmp.eq.s32.totalorder %s26, 0
      %p86 = por %p84, %p85
      %s88 = sadd.s32 %s87, 1
      %p91 = scmp.eq.s32.totalorder %s20, 1
      %p92 = scmp.ne.s32.totalorder %s87, %s89
      %p93 = scmp.eq.s32.totalorder %s20, 0
      %p94 = por %p92, %p93
      %p95 = scmp.ne.s32.totalorder %s87, %s89
      %p96 = scmp.eq.s32.totalorder %s25, 1
      %p97 = por %p95, %p96
      %p98 = scmp.ne.s32.totalorder %s89, %s90
      %p99 = scmp.eq.s32.totalorder %s25, 0
      %p100 = por %p98, %p99
      %p101 = scmp.ne.s32.totalorder %s89, %s90
      %p102 = scmp.eq.s32.totalorder %s26, 1
      %p103 = por %p101, %p102
      %p105 = scmp.ne.s32.totalorder %s90, %s104
      %p106 = scmp.eq.s32.totalorder %s26, 0
      %p107 = por %p105, %p106
      %s108 = ssub.s32 %s28, %s35
      %p109 = scmp.eq.s32.totalorder %s108, 0
      %s111 = sadd.s32 %s110, 1
      %s112 = scalar_select %p109, %s110, %s111
      %p115 = pneg %p109
      %p116 = scmp.eq.s32.totalorder %s20, 1
      %p117 = por %p115, %p116
      %p118 = scmp.ne.s32.totalorder %s110, %s113
      %p119 = scmp.eq.s32.totalorder %s20, 0
      %p120 = por %p118, %p119
      %p121 = scmp.ne.s32.totalorder %s110, %s113
      %p122 = scmp.eq.s32.totalorder %s25, 1
      %p123 = por %p121, %p122
      %p124 = scmp.ne.s32.totalorder %s113, %s114
      %p125 = scmp.eq.s32.totalorder %s25, 0
      %p126 = por %p124, %p125
      %p127 = scmp.ne.s32.totalorder %s113, %s114
      %p128 = scmp.eq.s32.totalorder %s26, 1
      %p129 = por %p127, %p128
      %p131 = scmp.ne.s32.totalorder %s114, %s130
      %p132 = scmp.eq.s32.totalorder %s26, 0
      %p133 = por %p131, %p132
      %s134 = ssub.s32 %s28, %s35
      %p135 = scmp.eq.s32.totalorder %s134, 0
      %s137 = sadd.s32 %s136, 1
      %s138 = scalar_select %p135, %s136, %s137
      %p141 = pneg %p135
      %p142 = scmp.eq.s32.totalorder %s20, 1
      %p143 = por %p141, %p142
      %p144 = scmp.ne.s32.totalorder %s136, %s139
      %p145 = scmp.eq.s32.totalorder %s20, 0
      %p146 = por %p144, %p145
      %p147 = scmp.ne.s32.totalorder %s136, %s139
      %p148 = scmp.eq.s32.totalorder %s25, 1
      %p149 = por %p147, %p148
      %p150 = scmp.ne.s32.totalorder %s139, %s140
      %p151 = scmp.eq.s32.totalorder %s25, 0
      %p152 = por %p150, %p151
      %p153 = scmp.ne.s32.totalorder %s139, %s140
      %p154 = scmp.eq.s32.totalorder %s26, 1
      %p155 = por %p153, %p154
      %p157 = scmp.ne.s32.totalorder %s140, %s156
      %p158 = scmp.eq.s32.totalorder %s26, 0
      %p159 = por %p157, %p158
      %s160 = ssub.s32 %s28, %s35
      %p161 = scmp.eq.s32.totalorder %s160, 0
      %s163 = sadd.s32 %s162, 1
      %s164 = scalar_select %p161, %s162, %s163
      %p167 = pneg %p161
      %p168 = scmp.eq.s32.totalorder %s20, 1
      %p169 = por %p167, %p168
      %p170 = scmp.ne.s32.totalorder %s162, %s165
      %p171 = scmp.eq.s32.totalorder %s20, 0
      %p172 = por %p170, %p171
      %p173 = scmp.ne.s32.totalorder %s162, %s165
      %p174 = scmp.eq.s32.totalorder %s25, 1
      %p175 = por %p173, %p174
      %p176 = scmp.ne.s32.totalorder %s165, %s166
      %p177 = scmp.eq.s32.totalorder %s25, 0
      %p178 = por %p176, %p177
      %p179 = scmp.ne.s32.totalorder %s165, %s166
      %p180 = scmp.eq.s32.totalorder %s26, 1
      %p181 = por %p179, %p180
      %p183 = scmp.ne.s32.totalorder %s166, %s182
      %p184 = scmp.eq.s32.totalorder %s26, 0
      %p185 = por %p183, %p184
      %s187 = sadd.s32 %s186, 1
      %p190 = scmp.eq.s32.totalorder %s20, 1
      %p191 = scmp.ne.s32.totalorder %s186, %s188
      %p192 = scmp.eq.s32.totalorder %s20, 0
      %p193 = por %p191, %p192
      %p194 = scmp.ne.s32.totalorder %s186, %s188
      %p195 = scmp.eq.s32.totalorder %s25, 1
      %p196 = por %p194, %p195
      %p197 = scmp.ne.s32.totalorder %s188, %s189
      %p198 = scmp.eq.s32.totalorder %s25, 0
      %p199 = por %p197, %p198
      %p200 = scmp.ne.s32.totalorder %s188, %s189
      %p201 = scmp.eq.s32.totalorder %s26, 1
      %p202 = por %p200, %p201
      %p204 = scmp.ne.s32.totalorder %s189, %s203
      %p205 = scmp.eq.s32.totalorder %s26, 0
      %p206 = por %p204, %p205
      %s207 = ssub.s32 %s27, %s39
      %p208 = scmp.eq.s32.totalorder %s207, 0
      %s210 = sadd.s32 %s209, 1
      %s211 = scalar_select %p208, %s209, %s210
      %p214 = pneg %p208
      %p215 = scmp.eq.s32.totalorder %s20, 1
      %p216 = por %p214, %p215
      %p217 = scmp.ne.s32.totalorder %s209, %s212
      %p218 = scmp.eq.s32.totalorder %s20, 0
      %p219 = por %p217, %p218
      %p220 = scmp.ne.s32.totalorder %s209, %s212
      %p221 = scmp.eq.s32.totalorder %s25, 1
      %p222 = por %p220, %p221
      %p223 = scmp.ne.s32.totalorder %s212, %s213
      %p224 = scmp.eq.s32.totalorder %s25, 0
      %p225 = por %p223, %p224
      %p226 = scmp.ne.s32.totalorder %s212, %s213
      %p227 = scmp.eq.s32.totalorder %s26, 1
      %p228 = por %p226, %p227
      %p230 = scmp.ne.s32.totalorder %s213, %s229
      %p231 = scmp.eq.s32.totalorder %s26, 0
      %p232 = por %p230, %p231
      %p233 = scmp.le.s32.totalorder 1, %s20
      %p234 = scmp.lt.s32.totalorder %s20, 3
      %p235 = pnand %p233, %p234
      %p236 = pneg %p235
      // Predicated region
      $region9: #{tpu_custom_call.1} parent=5 // pred_check
        _
      $region10: #{tpu_custom_call.1} parent=5 // pred_check_branch
        %238 = sbr.rel (%p235) target = $region12
      $region11: #{tpu_custom_call.1} parent=5 // pred_region
        %s239 = ssub.s32 %s20, 1
        // Predicated region
        $region13: #{tpu_custom_call.1} parent=11 // pred_check
          %p240 = pneg %p79
        $region14: #{tpu_custom_call.1} parent=11 // pred_check_branch
          %242 = sbr.rel (%p240) target = $region16
        $region15: #{tpu_custom_call.1} parent=11 // pred_region
          _
        $region16: #{tpu_custom_call.1} parent=11 // pred_fallthru
          _
        // Predicated region
        $region17: #{tpu_custom_call.1} parent=11 // pred_check
          %p243 = pneg %p100
        $region18: #{tpu_custom_call.1} parent=11 // pred_check_branch
          %245 = sbr.rel (%p243) target = $region20
        $region19: #{tpu_custom_call.1} parent=11 // pred_region
          _
        $region20: #{tpu_custom_call.1} parent=11 // pred_fallthru
          _
        // Predicated region
        $region21: #{tpu_custom_call.1} parent=11 // pred_check
          %p246 = pneg %p126
        $region22: #{tpu_custom_call.1} parent=11 // pred_check_branch
          %248 = sbr.rel (%p246) target = $region24
        $region23: #{tpu_custom_call.1} parent=11 // pred_region
          %s249 = smul.u32 2, %s30
          %s251 = ssub.s32 4096, 4096
          %252 = vsyncadd [#allocation6], %s251
          %s253 = smul.addr %s249, 128
          %s254 = scalar_lea.hbm %s3, %s253
          %s255 = sshll.u32 [#allocation5], 4
          %s256 = int_to_ptr.vmem [resolvable:$true] %s255
          %261 = dma.hbm_to_vmem [thread:$0]  %s254, 4096, %s256, [#allocation6], 256, 256, 16
        $region24: #{tpu_custom_call.1} parent=11 // pred_fallthru
          _
        // Predicated region
        $region25: #{tpu_custom_call.1} parent=11 // pred_check
          %p262 = pneg %p152
        $region26: #{tpu_custom_call.1} parent=11 // pred_check_branch
          %264 = sbr.rel (%p262) target = $region28
        $region27: #{tpu_custom_call.1} parent=11 // pred_region
          %s265 = smul.u32 2, %s30
          %p266 = scmp.lt.s32.totalorder %s265, 1
          %s267 = scalar_select %p266, %s265, 1
          %s268 = scalar_lea.vmem %s4, %s267
          %s269 = smul.u32 2, %s30
        $region28: #{tpu_custom_call.1} parent=11 // pred_fallthru
          _
        // Predicated region
        $region29: #{tpu_custom_call.1} parent=11 // pred_check
          %p270 = pneg %p178
        $region30: #{tpu_custom_call.1} parent=11 // pred_check_branch
          %272 = sbr.rel (%p270) target = $region32
        $region31: #{tpu_custom_call.1} parent=11 // pred_region
          %s273 = smul.u32 32, %s30
          %s275 = ssub.s32 4096, 4096
          %276 = vsyncadd [#allocation6], %s275
          %s277 = smul.addr %s273, 128
          %s278 = scalar_lea.hbm %s5, %s277
          %s279 = sshll.u32 [#allocation7], 4
          %s280 = int_to_ptr.vmem [resolvable:$true] %s279
          %285 = dma.hbm_to_vmem [thread:$0]  %s278, 4096, %s280, [#allocation6], 128, 128, 8
        $region32: #{tpu_custom_call.1} parent=11 // pred_fallthru
          _
        // Predicated region
        $region33: #{tpu_custom_call.1} parent=11 // pred_check
          %p286 = pneg %p199
        $region34: #{tpu_custom_call.1} parent=11 // pred_check_branch
          %288 = sbr.rel (%p286) target = $region36
        $region35: #{tpu_custom_call.1} parent=11 // pred_region
          _
        $region36: #{tpu_custom_call.1} parent=11 // pred_fallthru
          _
      $region12: #{tpu_custom_call.1} parent=5 // pred_fallthru
        _
      %p289 = scmp.lt.s32.totalorder %s20, 2
      // Predicated region
      $region37: #{tpu_custom_call.1} parent=5 // pred_check
        %p290 = pneg %p289
      $region38: #{tpu_custom_call.1} parent=5 // pred_check_branch
        %292 = sbr.rel (%p290) target = $region40
      $region39: #{tpu_custom_call.1} parent=5 // pred_region
        // Predicated region
        $region41: #{tpu_custom_call.1} parent=39 // pred_check
          %p293 = pneg %p52
        $region42: #{tpu_custom_call.1} parent=39 // pred_check_branch
          %295 = sbr.rel (%p293) target = $region44
        $region43: #{tpu_custom_call.1} parent=39 // pred_region
          %s296 = sand.u32 %s42, 1
          %s297 = scalar_lea.sflag [#allocation3], %s296
          %s298 = sand.u32 %s42, 1
          %s299 = smul.addr %s298, 8
          %s300 = scalar_lea.vmem [#allocation2], %s299
          %s302 = ssub.s32 128, 128
          %303 = vsyncadd %s297, %s302
          %s304 = smul.addr %s27, 128
          %s305 = scalar_lea.hbm %s0, %s304
          %s307 = sshll.u32 %s300, 4
          %s308 = int_to_ptr.vmem [resolvable:$true] %s307
          %310 = dma.hbm_to_vmem [thread:$0]  %s305, 128, %s308, %s297
        $region44: #{tpu_custom_call.1} parent=39 // pred_fallthru
          _
      $region40: #{tpu_custom_call.1} parent=5 // pred_fallthru
        _
      %p311 = scmp.le.s32.totalorder 1, %s20
      %p312 = scmp.lt.s32.totalorder %s20, 3
      %p313 = pnand %p311, %p312
      %p314 = pneg %p313
      // Predicated region
      $region45: #{tpu_custom_call.1} parent=5 // pred_check
        _
      $region46: #{tpu_custom_call.1} parent=5 // pred_check_branch
        %316 = sbr.rel (%p313) target = $region48
      $region47: #{tpu_custom_call.1} parent=5 // pred_region
        %s317 = ssub.s32 %s20, 1
        %s318 = sand.u32 %s45, 1
        %s319 = scalar_lea.sflag [#allocation3], %s318
        %s320 = sand.u32 %s45, 1
        %s321 = smul.addr %s320, 8
        %s322 = scalar_lea.vmem [#allocation2], %s321
        // Predicated region
        $region49: #{tpu_custom_call.1} parent=47 // pred_check
          %p323 = pneg %p58
        $region50: #{tpu_custom_call.1} parent=47 // pred_check_branch
          %325 = sbr.rel (%p323) target = $region52
        $region51: #{tpu_custom_call.1} parent=47 // pred_region
          %326 = dma.done %s319, 128
        $region52: #{tpu_custom_call.1} parent=47 // pred_fallthru
          _
        // Predicated region
        $region53: #{tpu_custom_call.1} parent=47 // pred_check
          %p327 = pneg %p126
        $region54: #{tpu_custom_call.1} parent=47 // pred_check_branch
          %329 = sbr.rel (%p327) target = $region56
        $region55: #{tpu_custom_call.1} parent=47 // pred_region
          %330 = dma.done [#allocation6], 4096
        $region56: #{tpu_custom_call.1} parent=47 // pred_fallthru
          _
        // Predicated region
        $region57: #{tpu_custom_call.1} parent=47 // pred_check
          %p331 = pneg %p178
        $region58: #{tpu_custom_call.1} parent=47 // pred_check_branch
          %333 = sbr.rel (%p331) target = $region60
        $region59: #{tpu_custom_call.1} parent=47 // pred_region
          %334 = dma.done [#allocation6], 4096
        $region60: #{tpu_custom_call.1} parent=47 // pred_fallthru
          _
        %s335 = sand.u32 %s45, 1
        %s336 = scalar_lea.sflag [#allocation3], %s335
        %s337 = sand.u32 %s45, 1
        %s338 = smul.addr %s337, 8
        %s339 = scalar_lea.vmem [#allocation2], %s338
        %p340 = pneg %p58
        %p341 = pneg %p55
        %p342 = pneg %p79
        %p343 = pneg %p76
        %p344 = pneg %p100
        %p345 = pneg %p97
        %p346 = pneg %p126
        %p347 = pneg %p123
        %s348 = smul.u32 2, %s30
        %p349 = scmp.lt.s32.totalorder %s348, 1
        %s350 = scalar_select %p349, %s348, 1
        %s351 = scalar_lea.vmem %s4, %s350
        %p352 = pneg %p152
        %p353 = pneg %p149
        %p354 = pneg %p178
        %p355 = pneg %p175
        %p356 = pneg %p199
        %p357 = pneg %p196
        %p358 = pneg %p225
        %p359 = pneg %p222
        %s360 = sand.u32 %s212, 1
        %s361 = scalar_lea.sflag [#allocation4], %s360
        %s362 = sand.u32 %s212, 1
        %s363 = smul.addr %s362, 8
        %s364 = scalar_lea.vmem [#allocation8], %s363
        %s365 = smul.u32 2, %s30
        %s366 = smul.u32 2, %s30
        %p367 = scmp.lt.s32.totalorder %s366, 1
        %s368 = scalar_select %p367, %s366, 1
        %s369 = scalar_lea.vmem %s4, %s368
        %s370 = smul.u32 2, %s30
        %s371 = smul.u32 32, %s30
        %v372 = vld [vmem:[%s322] sm:$0xff]
        %373 = vadd.xlane.f32.xlu0 %v372
        %v374 = vpop.xlane.xlu0 %373
        %v375 = vrcp.pop 128.0
        %v376 = vmul.f32 %v374, %v375
        %v377 = vsub.f32 %v372, %v376
        %v378 = vmul.f32 %v377, %v377
        %379 = vadd.xlane.f32.xlu0 %v378
        %v380 = vpop.xlane.xlu0 %379
        %v381 = vmul.f32 %v380, %v375
        %v382 = vadd.f32 %v381, 1e-05
        %v383 = vrsqrt.pop %v382
        %v384 = vmul.f32 %v377, %v383
        %v385 = vld [vmem:[%s1] sm:$0x1]
        %v387 = vlaneseq
        %v388 = vshrl.u32 %v387, 7
        %v389 = vsub.s32 0, %v388
        %v390 = vrot.slane %v385, %v389
        %v392 = vmul.f32 %v384, %v390
        %v393 = vld [vmem:[%s2] sm:$0x1]
        %v395 = vlaneseq
        %v396 = vshrl.u32 %v395, 7
        %v397 = vsub.s32 0, %v396
        %v398 = vrot.slane %v393, %v397
        %v400 = vadd.f32 %v392, %v398
        %v401 = vld [vmem:[#allocation5] sm:$0xff]
        %v402 = vld [vmem:[#allocation5 + $0x8] sm:$0xff]
        %v403 = vld [vmem:[#allocation5 + $0x10] sm:$0xff]
        %v404 = vld [vmem:[#allocation5 + $0x18] sm:$0xff]
        %v405 = vld [vmem:[#allocation5 + $0x20] sm:$0xff]
        %v406 = vld [vmem:[#allocation5 + $0x28] sm:$0xff]
        %v407 = vld [vmem:[#allocation5 + $0x30] sm:$0xff]
        %v408 = vld [vmem:[#allocation5 + $0x38] sm:$0xff]
        %v409 = vld [vmem:[#allocation5 + $0x40] sm:$0xff]
        %v410 = vld [vmem:[#allocation5 + $0x48] sm:$0xff]
        %v411 = vld [vmem:[#allocation5 + $0x50] sm:$0xff]
        %v412 = vld [vmem:[#allocation5 + $0x58] sm:$0xff]
        %v413 = vld [vmem:[#allocation5 + $0x60] sm:$0xff]
        %v414 = vld [vmem:[#allocation5 + $0x68] sm:$0xff]
        %v415 = vld [vmem:[#allocation5 + $0x70] sm:$0xff]
        %v416 = vld [vmem:[#allocation5 + $0x78] sm:$0xff]
        %v417 = vld [vmem:[#allocation5 + $0x80] sm:$0xff]
        %v418 = vld [vmem:[#allocation5 + $0x88] sm:$0xff]
        %v419 = vld [vmem:[#allocation5 + $0x90] sm:$0xff]
        %v420 = vld [vmem:[#allocation5 + $0x98] sm:$0xff]
        %v421 = vld [vmem:[#allocation5 + $0xa0] sm:$0xff]
        %v422 = vld [vmem:[#allocation5 + $0xa8] sm:$0xff]
        %v423 = vld [vmem:[#allocation5 + $0xb0] sm:$0xff]
        %v424 = vld [vmem:[#allocation5 + $0xb8] sm:$0xff]
        %v425 = vld [vmem:[#allocation5 + $0xc0] sm:$0xff]
        %v426 = vld [vmem:[#allocation5 + $0xc8] sm:$0xff]
        %v427 = vld [vmem:[#allocation5 + $0xd0] sm:$0xff]
        %v428 = vld [vmem:[#allocation5 + $0xd8] sm:$0xff]
        %v429 = vld [vmem:[#allocation5 + $0xe0] sm:$0xff]
        %v430 = vld [vmem:[#allocation5 + $0xe8] sm:$0xff]
        %v431 = vld [vmem:[#allocation5 + $0xf0] sm:$0xff]
        %v432 = vld [vmem:[#allocation5 + $0xf8] sm:$0xff]
        %v433 = vld [vmem:[%s369] sm:$0x3]
        %v435 = vlaneseq
        %v436 = vshrl.u32 %v435, 7
        %v437 = vsub.s32 0, %v436
        %v438 = vrot.slane %v433, %v437
        %v439 = vlaneseq
        %v440 = vshrl.u32 %v439, 7
        %v441 = vsub.s32 1, %v440
        %v442 = vrot.slane %v433, %v441
        %445 = vmatprep.subr.mxu0 %v402
        %446 = vmatpush1.msra.mxu0 %v401
        %447 = vmatprep.subr.mxu0 %v404
        %448 = vmatpush1.msra.mxu0 %v403
        %449 = vmatprep.subr.mxu0 %v406
        %450 = vmatpush1.msra.mxu0 %v405
        %451 = vmatprep.subr.mxu0 %v408
        %452 = vmatpush1.msra.mxu0 %v407
        %453 = vmatprep.subr.mxu0 %v410
        %454 = vmatpush1.msra.mxu0 %v409
        %455 = vmatprep.subr.mxu0 %v412
        %456 = vmatpush1.msra.mxu0 %v411
        %457 = vmatprep.subr.mxu0 %v414
        %458 = vmatpush1.msra.mxu0 %v413
        %459 = vmatprep.subr.mxu0 %v416
        %460 = vmatpush1.msra.mxu0 %v415
        %461 = vmatprep.subr.mxu0 %v418
        %462 = vmatpush1.msra.mxu0 %v417
        %463 = vmatprep.subr.mxu0 %v420
        %464 = vmatpush1.msra.mxu0 %v419
        %465 = vmatprep.subr.mxu0 %v422
        %466 = vmatpush1.msra.mxu0 %v421
        %467 = vmatprep.subr.mxu0 %v424
        %468 = vmatpush1.msra.mxu0 %v423
        %469 = vmatprep.subr.mxu0 %v426
        %470 = vmatpush1.msra.mxu0 %v425
        %471 = vmatprep.subr.mxu0 %v428
        %472 = vmatpush1.msra.mxu0 %v427
        %473 = vmatprep.subr.mxu0 %v430
        %474 = vmatpush1.msra.mxu0 %v429
        %475 = vmatprep.subr.mxu0 %v432
        %476 = vmatpush1.msra.mxu0 %v431
        %477 = vmatprep.subr.mxu0 0.0
        %478 = vmatpush1.msra.mxu0 0.0
        %479 = vmatprep.subr.mxu0 0.0
        %480 = vmatpush1.msra.mxu0 0.0
        %481 = vmatprep.subr.mxu0 0.0
        %482 = vmatpush1.msra.mxu0 0.0
        %483 = vmatprep.subr.mxu0 0.0
        %484 = vmatpush1.msra.mxu0 0.0
        %485 = vmatprep.subr.mxu0 0.0
        %486 = vmatpush1.msra.mxu0 0.0
        %487 = vmatprep.subr.mxu0 0.0
        %488 = vmatpush1.msra.mxu0 0.0
        %489 = vmatprep.subr.mxu0 0.0
        %490 = vmatpush1.msra.mxu0 0.0
        %491 = vmatprep.subr.mxu0 0.0
        %492 = vmatpush1.msra.mxu0 0.0
        %493 = vmatprep.subr.mxu0 0.0
        %494 = vmatpush1.msra.mxu0 0.0
        %495 = vmatprep.subr.mxu0 0.0
        %496 = vmatpush1.msra.mxu0 0.0
        %497 = vmatprep.subr.mxu0 0.0
        %498 = vmatpush1.msra.mxu0 0.0
        %499 = vmatprep.subr.mxu0 0.0
        %500 = vmatpush1.msra.mxu0 0.0
        %501 = vmatprep.subr.mxu0 0.0
        %502 = vmatpush1.msra.mxu0 0.0
        %503 = vmatprep.subr.mxu0 0.0
        %504 = vmatpush1.msra.mxu0 0.0
        %505 = vmatprep.subr.mxu0 0.0
        %506 = vmatpush1.msra.mxu0 0.0
        %507 = vmatprep.subr.mxu0 0.0
        %508 = vmatpush1.msra.mxu0 0.0
        %509 = vmatprep.mubr.f32.mxu0 0.0
        %510 = vmatmul.mubr.f32.gmra.mrb[0].mxu0 %v400
        %v511 = vpop.f32.mrb[0].mxu0
        %v512 = vadd.f32 %v438, %v511
        %v513 = vpop.f32.mrb[0].mxu0
        %v514 = vadd.f32 %v442, %v513
        %515 = vdwg.mxu0
        %v516 = vmul.f32 %v512, 0.5
        %v517 = vmul.f32 %v514, 0.5
        %v518 = vmul.f32 %v512, 0.70710677
        %v519 = vmul.f32 %v514, 0.70710677
        %v520 = verf.f32.pop %v518
        %v521 = verf.f32.pop %v519
        %v522 = vadd.f32 %v520, 1.0
        %v523 = vadd.f32 %v521, 1.0
        %v524 = vmul.f32 %v516, %v522
        %v525 = vmul.f32 %v517, %v523
        %v526 = vld [vmem:[#allocation7] sm:$0xff]
        %v527 = vld [vmem:[#allocation7 + $0x8] sm:$0xff]
        %v528 = vld [vmem:[#allocation7 + $0x10] sm:$0xff]
        %v529 = vld [vmem:[#allocation7 + $0x18] sm:$0xff]
        %v530 = vld [vmem:[#allocation7 + $0x20] sm:$0xff]
        %v531 = vld [vmem:[#allocation7 + $0x28] sm:$0xff]
        %v532 = vld [vmem:[#allocation7 + $0x30] sm:$0xff]
        %v533 = vld [vmem:[#allocation7 + $0x38] sm:$0xff]
        %v534 = vld [vmem:[#allocation7 + $0x40] sm:$0xff]
        %v535 = vld [vmem:[#allocation7 + $0x48] sm:$0xff]
        %v536 = vld [vmem:[#allocation7 + $0x50] sm:$0xff]
        %v537 = vld [vmem:[#allocation7 + $0x58] sm:$0xff]
        %v538 = vld [vmem:[#allocation7 + $0x60] sm:$0xff]
        %v539 = vld [vmem:[#allocation7 + $0x68] sm:$0xff]
        %v540 = vld [vmem:[#allocation7 + $0x70] sm:$0xff]
        %v541 = vld [vmem:[#allocation7 + $0x78] sm:$0xff]
        %v542 = vld [vmem:[#allocation7 + $0x80] sm:$0xff]
        %v543 = vld [vmem:[#allocation7 + $0x88] sm:$0xff]
        %v544 = vld [vmem:[#allocation7 + $0x90] sm:$0xff]
        %v545 = vld [vmem:[#allocation7 + $0x98] sm:$0xff]
        %v546 = vld [vmem:[#allocation7 + $0xa0] sm:$0xff]
        %v547 = vld [vmem:[#allocation7 + $0xa8] sm:$0xff]
        %v548 = vld [vmem:[#allocation7 + $0xb0] sm:$0xff]
        %v549 = vld [vmem:[#allocation7 + $0xb8] sm:$0xff]
        %v550 = vld [vmem:[#allocation7 + $0xc0] sm:$0xff]
        %v551 = vld [vmem:[#allocation7 + $0xc8] sm:$0xff]
        %v552 = vld [vmem:[#allocation7 + $0xd0] sm:$0xff]
        %v553 = vld [vmem:[#allocation7 + $0xd8] sm:$0xff]
        %v554 = vld [vmem:[#allocation7 + $0xe0] sm:$0xff]
        %v555 = vld [vmem:[#allocation7 + $0xe8] sm:$0xff]
        %v556 = vld [vmem:[#allocation7 + $0xf0] sm:$0xff]
        %v557 = vld [vmem:[#allocation7 + $0xf8] sm:$0xff]
        %v558 = vld [vmem:[%s6] sm:$0x1]
        %v560 = vlaneseq
        %v561 = vshrl.u32 %v560, 7
        %v562 = vsub.s32 0, %v561
        %v563 = vrot.slane %v558, %v562
        %565 = vmatprep.subr.mxu0 0.0
        %566 = vmatpush1.msra.mxu0 %v526
        %567 = vmatprep.subr.mxu0 0.0
        %568 = vmatpush1.msra.mxu0 %v527
        %569 = vmatprep.subr.mxu0 0.0
        %570 = vmatpush1.msra.mxu0 %v528
        %571 = vmatprep.subr.mxu0 0.0
        %572 = vmatpush1.msra.mxu0 %v529
        %573 = vmatprep.subr.mxu0 0.0
        %574 = vmatpush1.msra.mxu0 %v530
        %575 = vmatprep.subr.mxu0 0.0
        %576 = vmatpush1.msra.mxu0 %v531
        %577 = vmatprep.subr.mxu0 0.0
        %578 = vmatpush1.msra.mxu0 %v532
        %579 = vmatprep.subr.mxu0 0.0
        %580 = vmatpush1.msra.mxu0 %v533
        %581 = vmatprep.subr.mxu0 0.0
        %582 = vmatpush1.msra.mxu0 %v534
        %583 = vmatprep.subr.mxu0 0.0
        %584 = vmatpush1.msra.mxu0 %v535
        %585 = vmatprep.subr.mxu0 0.0
        %586 = vmatpush1.msra.mxu0 %v536
        %587 = vmatprep.subr.mxu0 0.0
        %588 = vmatpush1.msra.mxu0 %v537
        %589 = vmatprep.subr.mxu0 0.0
        %590 = vmatpush1.msra.mxu0 %v538
        %591 = vmatprep.subr.mxu0 0.0
        %592 = vmatpush1.msra.mxu0 %v539
        %593 = vmatprep.subr.mxu0 0.0
        %594 = vmatpush1.msra.mxu0 %v540
        %595 = vmatprep.subr.mxu0 0.0
        %596 = vmatpush1.msra.mxu0 %v541
        %597 = vmatprep.subr.mxu0 0.0
        %598 = vmatpush1.msra.mxu0 %v542
        %599 = vmatprep.subr.mxu0 0.0
        %600 = vmatpush1.msra.mxu0 %v543
        %601 = vmatprep.subr.mxu0 0.0
        %602 = vmatpush1.msra.mxu0 %v544
        %603 = vmatprep.subr.mxu0 0.0
        %604 = vmatpush1.msra.mxu0 %v545
        %605 = vmatprep.subr.mxu0 0.0
        %606 = vmatpush1.msra.mxu0 %v546
        %607 = vmatprep.subr.mxu0 0.0
        %608 = vmatpush1.msra.mxu0 %v547
        %609 = vmatprep.subr.mxu0 0.0
        %610 = vmatpush1.msra.mxu0 %v548
        %611 = vmatprep.subr.mxu0 0.0
        %612 = vmatpush1.msra.mxu0 %v549
        %613 = vmatprep.subr.mxu0 0.0
        %614 = vmatpush1.msra.mxu0 %v550
        %615 = vmatprep.subr.mxu0 0.0
        %616 = vmatpush1.msra.mxu0 %v551
        %617 = vmatprep.subr.mxu0 0.0
        %618 = vmatpush1.msra.mxu0 %v552
        %619 = vmatprep.subr.mxu0 0.0
        %620 = vmatpush1.msra.mxu0 %v553
        %621 = vmatprep.subr.mxu0 0.0
        %622 = vmatpush1.msra.mxu0 %v554
        %623 = vmatprep.subr.mxu0 0.0
        %624 = vmatpush1.msra.mxu0 %v555
        %625 = vmatprep.subr.mxu0 0.0
        %626 = vmatpush1.msra.mxu0 %v556
        %627 = vmatprep.subr.mxu0 0.0
        %628 = vmatpush1.msra.mxu0 %v557
        %629 = vmatprep.mubr.f32.mxu0 %v525
        %630 = vmatmul.mubr.f32.gmra.mrb[0].mxu0 %v524
        %v631 = vpop.f32.mrb[0].mxu0
        %v632 = vadd.f32 %v563, %v631
        %v633 = vpop.f32.mrb[0].mxu0
        %634 = vdwg.mxu0
        %635 = vst [vmem:[%s364] sm:$0xff] %v632
        %s636 = sand.u32 %s212, 1
        %s637 = scalar_lea.sflag [#allocation4], %s636
        %s638 = sand.u32 %s212, 1
        %s639 = smul.addr %s638, 8
        %s640 = scalar_lea.vmem [#allocation8], %s639
        // Predicated region
        $region61: #{tpu_custom_call.1} parent=47 // pred_check
          %p641 = pneg %p222
        $region62: #{tpu_custom_call.1} parent=47 // pred_check_branch
          %643 = sbr.rel (%p641) target = $region64
        $region63: #{tpu_custom_call.1} parent=47 // pred_region
          %s645 = ssub.s32 128, 128
          %646 = vsyncadd %s637, %s645
          %s647 = smul.addr %s29, 128
          %s648 = scalar_lea.hbm %s7, %s647
          %s650 = sshll.u32 %s640, 4
          %s651 = int_to_ptr.vmem [resolvable:$true] %s650
          %653 = dma.vmem_to_hbm [thread:$0]  %s651, 128, %s648, %s637
        $region64: #{tpu_custom_call.1} parent=47 // pred_fallthru
          _
      $region48: #{tpu_custom_call.1} parent=5 // pred_fallthru
        _
      %p654 = scmp.le.s32.totalorder 2, %s20
      // Predicated region
      $region65: #{tpu_custom_call.1} parent=5 // pred_check
        %p655 = pneg %p654
      $region66: #{tpu_custom_call.1} parent=5 // pred_check_branch
        %657 = sbr.rel (%p655) target = $region68
      $region67: #{tpu_custom_call.1} parent=5 // pred_region
        %s658 = ssub.s32 %s20, 2
        // Predicated region
        $region69: #{tpu_custom_call.1} parent=67 // pred_check
          %p659 = pneg %p228
        $region70: #{tpu_custom_call.1} parent=67 // pred_check_branch
          %661 = sbr.rel (%p659) target = $region72
        $region71: #{tpu_custom_call.1} parent=67 // pred_region
          %s662 = sand.u32 %s213, 1
          %s663 = scalar_lea.sflag [#allocation4], %s662
          %s664 = sand.u32 %s213, 1
          %s665 = smul.addr %s664, 8
          %s666 = scalar_lea.vmem [#allocation8], %s665
          %667 = dma.done %s663, 128
        $region72: #{tpu_custom_call.1} parent=67 // pred_fallthru
          _
      $region68: #{tpu_custom_call.1} parent=5 // pred_fallthru
        _
    $region6: #{tpu_custom_call.1} parent=1 // loop_footer
      %s24 = sadd.s32 1, %s20
    $region7: #{tpu_custom_call.1} parent=1 // loop_footer_branch
      %19 = sbr.rel target = $region3
    $region8: #{tpu_custom_call.1} parent=1 // loop_exit
      _
    %668 = vsyncpa [#allocation3], 1
    %s669 = scalar_lea.sflag [#allocation3], 1
    %670 = vsyncpa %s669, 1
    %671 = vsyncpa [#allocation6], 1
    %672 = vsyncpa [#allocation4], 1
    %s673 = scalar_lea.sflag [#allocation4], 1
    %674 = vsyncpa %s673, 1

// kernel: tpu_custom_call.1
$region0: #{tpu_custom_call.1}
  #allocation0 [shape = 'u32[]', space=smem, size = 0x4, offset = 0x4, fixed_abs, tag = 'smem constant byte address 0x4 - core index']
  #allocation1 [shape = 'u32[144,128]{1,0:T(1,128)}', space=vmem, size = 0x12000, scoped, tag = 'internal scratch']
  %s0 = inlined_call_operand.hbm [shape: f32[16,128], index: 0, kind: input, shape index: {}]
  %s1 = inlined_call_operand.vmem [shape: f32[1,128], index: 1, kind: input, shape index: {}]
  %s2 = inlined_call_operand.vmem [shape: f32[1,128], index: 2, kind: input, shape index: {}]
  %s3 = inlined_call_operand.hbm [shape: f32[128,256], index: 3, kind: input, shape index: {}]
  %s4 = inlined_call_operand.vmem [shape: f32[1,256], index: 4, kind: input, shape index: {}]
  %s5 = inlined_call_operand.hbm [shape: f32[256,128], index: 5, kind: input, shape index: {}]
  %s6 = inlined_call_operand.vmem [shape: f32[1,128], index: 6, kind: input, shape index: {}]
  %s7 = inlined_call_operand.hbm [shape: f32[16,128], index: 7, kind: output, shape index: {}]
  %s8 = sld [smem:[#allocation0]]
  $region73: #{tpu_custom_call.1} parent=0
    _
  %s10 = ssub.s32 1, %s8
  %s11 = scalar_select 0, %s10, %s8
  $region1: #{tpu_custom_call.1} parent=0
    #allocation2 [shape = 'u8[8192]{0}', space=vmem, size = 0x2000, scoped, tag = 'input window, operand 0']
    #allocation3 [shape = 's32[2]{0}', space=sflag, size = 0x8, scoped, tag = 'scoped memory for tpu_custom_call.1']
    #allocation4 [shape = 's32[2]{0}', space=sflag, size = 0x8, scoped, tag = 'scoped memory for tpu_custom_call.1']
    #allocation5 [shape = 'u8[131072]{0}', space=vmem, size = 0x20000, scoped, tag = 'input window, operand 3, single buffered']
    #allocation6 [shape = 's32[1]{0}', space=sflag, size = 0x4, scoped, tag = 'scoped memory for tpu_custom_call.1']
    #allocation7 [shape = 'u8[131072]{0}', space=vmem, size = 0x20000, scoped, tag = 'input window, operand 5, single buffered']
    #allocation8 [shape = 'u8[8192]{0}', space=vmem, size = 0x2000, scoped, tag = 'output window, operand 0']
    %12 = vsyncpa [#allocation3], 0
    %s13 = scalar_lea.sflag [#allocation3], 1
    %14 = vsyncpa %s13, 0
    %15 = vsyncpa [#allocation6], 0
    %16 = vsyncpa [#allocation4], 0
    %s17 = scalar_lea.sflag [#allocation4], 1
    %18 = vsyncpa %s17, 0
    loop: start=0, step=1, limit=4
    $region2: #{tpu_custom_call.1} parent=1 // loop_pre_header
      _
    $region3: #{tpu_custom_call.1} parent=1 // loop_header
      %s20 = sphi 0, %s24
      %p21 = scmp.ge.s32.totalorder %s20, 4
      %s27 = sphi 0, %s39
      %s28 = sphi 0, %s35
      %s29 = sphi 0, %s27
      %s30 = sphi 0, %s28
      %s31 = sphi 0, %s29
      %s32 = sphi 0, %s30
      %s42 = sphi 0, %s44
      %s45 = sphi 0, %s42
      %s46 = sphi 0, %s45
      %s62 = sphi 0, %s46
      %s66 = sphi 0, %s66
      %s68 = sphi 0, %s66
      %s69 = sphi 0, %s68
      %s83 = sphi 0, %s69
      %s87 = sphi 0, %s87
      %s89 = sphi 0, %s87
      %s90 = sphi 0, %s89
      %s104 = sphi 0, %s90
      %s110 = sphi 0, %s112
      %s113 = sphi 0, %s110
      %s114 = sphi 0, %s113
      %s130 = sphi 0, %s114
      %s136 = sphi 0, %s138
      %s139 = sphi 0, %s136
      %s140 = sphi 0, %s139
      %s156 = sphi 0, %s140
      %s162 = sphi 0, %s164
      %s165 = sphi 0, %s162
      %s166 = sphi 0, %s165
      %s182 = sphi 0, %s166
      %s186 = sphi 0, %s186
      %s188 = sphi 0, %s186
      %s189 = sphi 0, %s188
      %s203 = sphi 0, %s189
      %s209 = sphi 0, %s211
      %s212 = sphi 0, %s209
      %s213 = sphi 0, %s212
      %s229 = sphi 0, %s213
    $region4: #{tpu_custom_call.1} parent=1 // loop_header_branch
      %23 = sbr.rel (%p21) target = $region8
    $region5: #{tpu_custom_call.1} parent=1 // loop_body
      %s25 = ssub.s32 %s20, 1
      %s26 = ssub.s32 %s20, 2
      %s33 = sadd.s32 1, %s28
      %p34 = scmp.ge.s32.totalorder %s33, 1
      %s35 = scalar_select %p34, 0, %s33
      %s36 = sadd.s32 1, %s27
      %s37 = scalar_select %p34, %s36, %s27
      %p38 = scmp.ge.s32.totalorder %s37, 2
      %s39 = scalar_select %p38, 0, %s37
      %s40 = ssub.s32 %s27, %s39
      %p41 = scmp.eq.s32.totalorder %s40, 0
      %s43 = sadd.s32 %s42, 1
      %s44 = scalar_select %p41, %s42, %s43
      %p47 = pneg %p41
      %p48 = scmp.eq.s32.totalorder %s20, 1
      %p49 = por %p47, %p48
      %p50 = scmp.ne.s32.totalorder %s42, %s45
      %p51 = scmp.eq.s32.totalorder %s20, 0
      %p52 = por %p50, %p51
      %p53 = scmp.ne.s32.totalorder %s42, %s45
      %p54 = scmp.eq.s32.totalorder %s25, 1
      %p55 = por %p53, %p54
      %p56 = scmp.ne.s32.totalorder %s45, %s46
      %p57 = scmp.eq.s32.totalorder %s25, 0
      %p58 = por %p56, %p57
      %p59 = scmp.ne.s32.totalorder %s45, %s46
      %p60 = scmp.eq.s32.totalorder %s26, 1
      %p61 = por %p59, %p60
      %p63 = scmp.ne.s32.totalorder %s46, %s62
      %p64 = scmp.eq.s32.totalorder %s26, 0
      %p65 = por %p63, %p64
      %s67 = sadd.s32 %s66, 1
      %p70 = scmp.eq.s32.totalorder %s20, 1
      %p71 = scmp.ne.s32.totalorder %s66, %s68
      %p72 = scmp.eq.s32.totalorder %s20, 0
      %p73 = por %p71, %p72
      %p74 = scmp.ne.s32.totalorder %s66, %s68
      %p75 = scmp.eq.s32.totalorder %s25, 1
      %p76 = por %p74, %p75
      %p77 = scmp.ne.s32.totalorder %s68, %s69
      %p78 = scmp.eq.s32.totalorder %s25, 0
      %p79 = por %p77, %p78
      %p80 = scmp.ne.s32.totalorder %s68, %s69
      %p81 = scmp.eq.s32.totalorder %s26, 1
      %p82 = por %p80, %p81
      %p84 = scmp.ne.s32.totalorder %s69, %s83
      %p85 = scmp.eq.s32.totalorder %s26, 0
      %p86 = por %p84, %p85
      %s88 = sadd.s32 %s87, 1
      %p91 = scmp.eq.s32.totalorder %s20, 1
      %p92 = scmp.ne.s32.totalorder %s87, %s89
      %p93 = scmp.eq.s32.totalorder %s20, 0
      %p94 = por %p92, %p93
      %p95 = scmp.ne.s32.totalorder %s87, %s89
      %p96 = scmp.eq.s32.totalorder %s25, 1
      %p97 = por %p95, %p96
      %p98 = scmp.ne.s32.totalorder %s89, %s90
      %p99 = scmp.eq.s32.totalorder %s25, 0
      %p100 = por %p98, %p99
      %p101 = scmp.ne.s32.totalorder %s89, %s90
      %p102 = scmp.eq.s32.totalorder %s26, 1
      %p103 = por %p101, %p102
      %p105 = scmp.ne.s32.totalorder %s90, %s104
      %p106 = scmp.eq.s32.totalorder %s26, 0
      %p107 = por %p105, %p106
      %s108 = ssub.s32 %s28, %s35
      %p109 = scmp.eq.s32.totalorder %s108, 0
      %s111 = sadd.s32 %s110, 1
      %s112 = scalar_select %p109, %s110, %s111
      %p115 = pneg %p109
      %p116 = scmp.eq.s32.totalorder %s20, 1
      %p117 = por %p115, %p116
      %p118 = scmp.ne.s32.totalorder %s110, %s113
      %p119 = scmp.eq.s32.totalorder %s20, 0
      %p120 = por %p118, %p119
      %p121 = scmp.ne.s32.totalorder %s110, %s113
      %p122 = scmp.eq.s32.totalorder %s25, 1
      %p123 = por %p121, %p122
      %p124 = scmp.ne.s32.totalorder %s113, %s114
      %p125 = scmp.eq.s32.totalorder %s25, 0
      %p126 = por %p124, %p125
      %p127 = scmp.ne.s32.totalorder %s113, %s114
      %p128 = scmp.eq.s32.totalorder %s26, 1
      %p129 = por %p127, %p128
      %p131 = scmp.ne.s32.totalorder %s114, %s130
      %p132 = scmp.eq.s32.totalorder %s26, 0
      %p133 = por %p131, %p132
      %s134 = ssub.s32 %s28, %s35
      %p135 = scmp.eq.s32.totalorder %s134, 0
      %s137 = sadd.s32 %s136, 1
      %s138 = scalar_select %p135, %s136, %s137
      %p141 = pneg %p135
      %p142 = scmp.eq.s32.totalorder %s20, 1
      %p143 = por %p141, %p142
      %p144 = scmp.ne.s32.totalorder %s136, %s139
      %p145 = scmp.eq.s32.totalorder %s20, 0
      %p146 = por %p144, %p145
      %p147 = scmp.ne.s32.totalorder %s136, %s139
      %p148 = scmp.eq.s32.totalorder %s25, 1
      %p149 = por %p147, %p148
      %p150 = scmp.ne.s32.totalorder %s139, %s140
      %p151 = scmp.eq.s32.totalorder %s25, 0
      %p152 = por %p150, %p151
      %p153 = scmp.ne.s32.totalorder %s139, %s140
      %p154 = scmp.eq.s32.totalorder %s26, 1
      %p155 = por %p153, %p154
      %p157 = scmp.ne.s32.totalorder %s140, %s156
      %p158 = scmp.eq.s32.totalorder %s26, 0
      %p159 = por %p157, %p158
      %s160 = ssub.s32 %s28, %s35
      %p161 = scmp.eq.s32.totalorder %s160, 0
      %s163 = sadd.s32 %s162, 1
      %s164 = scalar_select %p161, %s162, %s163
      %p167 = pneg %p161
      %p168 = scmp.eq.s32.totalorder %s20, 1
      %p169 = por %p167, %p168
      %p170 = scmp.ne.s32.totalorder %s162, %s165
      %p171 = scmp.eq.s32.totalorder %s20, 0
      %p172 = por %p170, %p171
      %p173 = scmp.ne.s32.totalorder %s162, %s165
      %p174 = scmp.eq.s32.totalorder %s25, 1
      %p175 = por %p173, %p174
      %p176 = scmp.ne.s32.totalorder %s165, %s166
      %p177 = scmp.eq.s32.totalorder %s25, 0
      %p178 = por %p176, %p177
      %p179 = scmp.ne.s32.totalorder %s165, %s166
      %p180 = scmp.eq.s32.totalorder %s26, 1
      %p181 = por %p179, %p180
      %p183 = scmp.ne.s32.totalorder %s166, %s182
      %p184 = scmp.eq.s32.totalorder %s26, 0
      %p185 = por %p183, %p184
      %s187 = sadd.s32 %s186, 1
      %p190 = scmp.eq.s32.totalorder %s20, 1
      %p191 = scmp.ne.s32.totalorder %s186, %s188
      %p192 = scmp.eq.s32.totalorder %s20, 0
      %p193 = por %p191, %p192
      %p194 = scmp.ne.s32.totalorder %s186, %s188
      %p195 = scmp.eq.s32.totalorder %s25, 1
      %p196 = por %p194, %p195
      %p197 = scmp.ne.s32.totalorder %s188, %s189
      %p198 = scmp.eq.s32.totalorder %s25, 0
      %p199 = por %p197, %p198
      %p200 = scmp.ne.s32.totalorder %s188, %s189
      %p201 = scmp.eq.s32.totalorder %s26, 1
      %p202 = por %p200, %p201
      %p204 = scmp.ne.s32.totalorder %s189, %s203
      %p205 = scmp.eq.s32.totalorder %s26, 0
      %p206 = por %p204, %p205
      %s207 = ssub.s32 %s27, %s39
      %p208 = scmp.eq.s32.totalorder %s207, 0
      %s210 = sadd.s32 %s209, 1
      %s211 = scalar_select %p208, %s209, %s210
      %p214 = pneg %p208
      %p215 = scmp.eq.s32.totalorder %s20, 1
      %p216 = por %p214, %p215
      %p217 = scmp.ne.s32.totalorder %s209, %s212
      %p218 = scmp.eq.s32.totalorder %s20, 0
      %p219 = por %p217, %p218
      %p220 = scmp.ne.s32.totalorder %s209, %s212
      %p221 = scmp.eq.s32.totalorder %s25, 1
      %p222 = por %p220, %p221
      %p223 = scmp.ne.s32.totalorder %s212, %s213
      %p224 = scmp.eq.s32.totalorder %s25, 0
      %p225 = por %p223, %p224
      %p226 = scmp.ne.s32.totalorder %s212, %s213
      %p227 = scmp.eq.s32.totalorder %s26, 1
      %p228 = por %p226, %p227
      %p230 = scmp.ne.s32.totalorder %s213, %s229
      %p231 = scmp.eq.s32.totalorder %s26, 0
      %p232 = por %p230, %p231
      %p233 = scmp.le.s32.totalorder 1, %s20
      %p234 = scmp.lt.s32.totalorder %s20, 3
      %p235 = pnand %p233, %p234
      %p236 = pneg %p235
      // Predicated region
      $region9: #{tpu_custom_call.1} parent=5 // pred_check
        _
      $region10: #{tpu_custom_call.1} parent=5 // pred_check_branch
        %238 = sbr.rel (%p235) target = $region12
      $region11: #{tpu_custom_call.1} parent=5 // pred_region
        %s239 = ssub.s32 %s20, 1
        // Predicated region
        $region13: #{tpu_custom_call.1} parent=11 // pred_check
          %p240 = pneg %p79
        $region14: #{tpu_custom_call.1} parent=11 // pred_check_branch
          %242 = sbr.rel (%p240) target = $region16
        $region15: #{tpu_custom_call.1} parent=11 // pred_region
          _
        $region16: #{tpu_custom_call.1} parent=11 // pred_fallthru
          _
        // Predicated region
        $region17: #{tpu_custom_call.1} parent=11 // pred_check
          %p243 = pneg %p100
        $region18: #{tpu_custom_call.1} parent=11 // pred_check_branch
          %245 = sbr.rel (%p243) target = $region20
        $region19: #{tpu_custom_call.1} parent=11 // pred_region
          _
        $region20: #{tpu_custom_call.1} parent=11 // pred_fallthru
          _
        // Predicated region
        $region21: #{tpu_custom_call.1} parent=11 // pred_check
          %p246 = pneg %p126
        $region22: #{tpu_custom_call.1} parent=11 // pred_check_branch
          %248 = sbr.rel (%p246) target = $region24
        $region23: #{tpu_custom_call.1} parent=11 // pred_region
          %s249 = smul.u32 2, %s30
          %s251 = ssub.s32 4096, 4096
          %252 = vsyncadd [#allocation6], %s251
          %s253 = smul.addr %s249, 128
          %s254 = scalar_lea.hbm %s3, %s253
          %s255 = sshll.u32 [#allocation5], 4
          %s256 = int_to_ptr.vmem [resolvable:$true] %s255
          %261 = dma.hbm_to_vmem [thread:$0]  %s254, 4096, %s256, [#allocation6], 256, 256, 16
        $region24: #{tpu_custom_call.1} parent=11 // pred_fallthru
          _
        // Predicated region
        $region25: #{tpu_custom_call.1} parent=11 // pred_check
          %p262 = pneg %p152
        $region26: #{tpu_custom_call.1} parent=11 // pred_check_branch
          %264 = sbr.rel (%p262) target = $region28
        $region27: #{tpu_custom_call.1} parent=11 // pred_region
          %s265 = smul.u32 2, %s30
          %p266 = scmp.lt.s32.totalorder %s265, 1
          %s267 = scalar_select %p266, %s265, 1
          %s268 = scalar_lea.vmem %s4, %s267
          %s269 = smul.u32 2, %s30
        $region28: #{tpu_custom_call.1} parent=11 // pred_fallthru
          _
        // Predicated region
        $region29: #{tpu_custom_call.1} parent=11 // pred_check
          %p270 = pneg %p178
        $region30: #{tpu_custom_call.1} parent=11 // pred_check_branch
          %272 = sbr.rel (%p270) target = $region32
        $region31: #{tpu_custom_call.1} parent=11 // pred_region
          %s273 = smul.u32 32, %s30
          %s275 = ssub.s32 4096, 4096
          %276 = vsyncadd [#allocation6], %s275
          %s277 = smul.addr %s273, 128
          %s278 = scalar_lea.hbm %s5, %s277
          %s279 = sshll.u32 [#allocation7], 4
          %s280 = int_to_ptr.vmem [resolvable:$true] %s279
          %285 = dma.hbm_to_vmem [thread:$0]  %s278, 4096, %s280, [#allocation6], 128, 128, 8
        $region32: #{tpu_custom_call.1} parent=11 // pred_fallthru
          _
        // Predicated region
        $region33: #{tpu_custom_call.1} parent=11 // pred_check
          %p286 = pneg %p199
        $region34: #{tpu_custom_call.1} parent=11 // pred_check_branch
          %288 = sbr.rel (%p286) target = $region36
        $region35: #{tpu_custom_call.1} parent=11 // pred_region
          _
        $region36: #{tpu_custom_call.1} parent=11 // pred_fallthru
          _
      $region12: #{tpu_custom_call.1} parent=5 // pred_fallthru
        _
      %p289 = scmp.lt.s32.totalorder %s20, 2
      // Predicated region
      $region37: #{tpu_custom_call.1} parent=5 // pred_check
        %p290 = pneg %p289
      $region38: #{tpu_custom_call.1} parent=5 // pred_check_branch
        %292 = sbr.rel (%p290) target = $region40
      $region39: #{tpu_custom_call.1} parent=5 // pred_region
        // Predicated region
        $region41: #{tpu_custom_call.1} parent=39 // pred_check
          %p293 = pneg %p52
        $region42: #{tpu_custom_call.1} parent=39 // pred_check_branch
          %295 = sbr.rel (%p293) target = $region44
        $region43: #{tpu_custom_call.1} parent=39 // pred_region
          %s296 = sand.u32 %s42, 1
          %s297 = scalar_lea.sflag [#allocation3], %s296
          %s298 = sand.u32 %s42, 1
          %s299 = smul.addr %s298, 8
          %s300 = scalar_lea.vmem [#allocation2], %s299
          %s302 = ssub.s32 128, 128
          %303 = vsyncadd %s297, %s302
          %s304 = smul.addr %s27, 128
          %s305 = scalar_lea.hbm %s0, %s304
          %s307 = sshll.u32 %s300, 4
          %s308 = int_to_ptr.vmem [resolvable:$true] %s307
          %310 = dma.hbm_to_vmem [thread:$0]  %s305, 128, %s308, %s297
        $region44: #{tpu_custom_call.1} parent=39 // pred_fallthru
          _
      $region40: #{tpu_custom_call.1} parent=5 // pred_fallthru
        _
      %p311 = scmp.le.s32.totalorder 1, %s20
      %p312 = scmp.lt.s32.totalorder %s20, 3
      %p313 = pnand %p311, %p312
      %p314 = pneg %p313
      // Predicated region
      $region45: #{tpu_custom_call.1} parent=5 // pred_check
        _
      $region46: #{tpu_custom_call.1} parent=5 // pred_check_branch
        %316 = sbr.rel (%p313) target = $region48
      $region47: #{tpu_custom_call.1} parent=5 // pred_region
        %s317 = ssub.s32 %s20, 1
        %s318 = sand.u32 %s45, 1
        %s319 = scalar_lea.sflag [#allocation3], %s318
        %s320 = sand.u32 %s45, 1
        %s321 = smul.addr %s320, 8
        %s322 = scalar_lea.vmem [#allocation2], %s321
        // Predicated region
        $region49: #{tpu_custom_call.1} parent=47 // pred_check
          %p323 = pneg %p58
        $region50: #{tpu_custom_call.1} parent=47 // pred_check_branch
          %325 = sbr.rel (%p323) target = $region52
        $region51: #{tpu_custom_call.1} parent=47 // pred_region
          %326 = dma.done %s319, 128
        $region52: #{tpu_custom_call.1} parent=47 // pred_fallthru
          _
        // Predicated region
        $region53: #{tpu_custom_call.1} parent=47 // pred_check
          %p327 = pneg %p126
        $region54: #{tpu_custom_call.1} parent=47 // pred_check_branch
          %329 = sbr.rel (%p327) target = $region56
        $region55: #{tpu_custom_call.1} parent=47 // pred_region
          %330 = dma.done [#allocation6], 4096
        $region56: #{tpu_custom_call.1} parent=47 // pred_fallthru
          _
        // Predicated region
        $region57: #{tpu_custom_call.1} parent=47 // pred_check
          %p331 = pneg %p178
        $region58: #{tpu_custom_call.1} parent=47 // pred_check_branch
          %333 = sbr.rel (%p331) target = $region60
        $region59: #{tpu_custom_call.1} parent=47 // pred_region
          %334 = dma.done [#allocation6], 4096
        $region60: #{tpu_custom_call.1} parent=47 // pred_fallthru
          _
        %s335 = sand.u32 %s45, 1
        %s336 = scalar_lea.sflag [#allocation3], %s335
        %s337 = sand.u32 %s45, 1
        %s338 = smul.addr %s337, 8
        %s339 = scalar_lea.vmem [#allocation2], %s338
        %p340 = pneg %p58
        %p341 = pneg %p55
        %p342 = pneg %p79
        %p343 = pneg %p76
        %p344 = pneg %p100
        %p345 = pneg %p97
        %p346 = pneg %p126
        %p347 = pneg %p123
        %s348 = smul.u32 2, %s30
        %p349 = scmp.lt.s32.totalorder %s348, 1
        %s350 = scalar_select %p349, %s348, 1
        %s351 = scalar_lea.vmem %s4, %s350
        %p352 = pneg %p152
        %p353 = pneg %p149
        %p354 = pneg %p178
        %p355 = pneg %p175
        %p356 = pneg %p199
        %p357 = pneg %p196
        %p358 = pneg %p225
        %p359 = pneg %p222
        %s360 = sand.u32 %s212, 1
        %s361 = scalar_lea.sflag [#allocation4], %s360
        %s362 = sand.u32 %s212, 1
        %s363 = smul.addr %s362, 8
        %s364 = scalar_lea.vmem [#allocation8], %s363
        %s365 = smul.u32 2, %s30
        %s366 = smul.u32 2, %s30
        %p367 = scmp.lt.s32.totalorder %s366, 1
        %s368 = scalar_select %p367, %s366, 1
        %s369 = scalar_lea.vmem %s4, %s368
        %s370 = smul.u32 2, %s30
        %s371 = smul.u32 32, %s30
        %v372 = vld [vmem:[%s322] sm:$0xff]
        %373 = vadd.xlane.f32.xlu0 %v372
        %v374 = vpop.xlane.xlu0 %373
        %v375 = vrcp.pop 128.0
        %v376 = vmul.f32 %v374, %v375
        %v377 = vsub.f32 %v372, %v376
        %v378 = vmul.f32 %v377, %v377
        %379 = vadd.xlane.f32.xlu0 %v378
        %v380 = vpop.xlane.xlu0 %379
        %v381 = vmul.f32 %v380, %v375
        %v382 = vadd.f32 %v381, 1e-05
        %v383 = vrsqrt.pop %v382
        %v384 = vmul.f32 %v377, %v383
        %v385 = vld [vmem:[%s1] sm:$0x1]
        %v387 = vlaneseq
        %v388 = vshrl.u32 %v387, 7
        %v389 = vsub.s32 0, %v388
        %v390 = vrot.slane %v385, %v389
        %v392 = vmul.f32 %v384, %v390
        %v393 = vld [vmem:[%s2] sm:$0x1]
        %v395 = vlaneseq
        %v396 = vshrl.u32 %v395, 7
        %v397 = vsub.s32 0, %v396
        %v398 = vrot.slane %v393, %v397
        %v400 = vadd.f32 %v392, %v398
        %v401 = vld [vmem:[#allocation5] sm:$0xff]
        %v402 = vld [vmem:[#allocation5 + $0x8] sm:$0xff]
        %v403 = vld [vmem:[#allocation5 + $0x10] sm:$0xff]
        %v404 = vld [vmem:[#allocation5 + $0x18] sm:$0xff]
        %v405 = vld [vmem:[#allocation5 + $0x20] sm:$0xff]
        %v406 = vld [vmem:[#allocation5 + $0x28] sm:$0xff]
        %v407 = vld [vmem:[#allocation5 + $0x30] sm:$0xff]
        %v408 = vld [vmem:[#allocation5 + $0x38] sm:$0xff]
        %v409 = vld [vmem:[#allocation5 + $0x40] sm:$0xff]
        %v410 = vld [vmem:[#allocation5 + $0x48] sm:$0xff]
        %v411 = vld [vmem:[#allocation5 + $0x50] sm:$0xff]
        %v412 = vld [vmem:[#allocation5 + $0x58] sm:$0xff]
        %v413 = vld [vmem:[#allocation5 + $0x60] sm:$0xff]
        %v414 = vld [vmem:[#allocation5 + $0x68] sm:$0xff]
        %v415 = vld [vmem:[#allocation5 + $0x70] sm:$0xff]
        %v416 = vld [vmem:[#allocation5 + $0x78] sm:$0xff]
        %v417 = vld [vmem:[#allocation5 + $0x80] sm:$0xff]
        %v418 = vld [vmem:[#allocation5 + $0x88] sm:$0xff]
        %v419 = vld [vmem:[#allocation5 + $0x90] sm:$0xff]
        %v420 = vld [vmem:[#allocation5 + $0x98] sm:$0xff]
        %v421 = vld [vmem:[#allocation5 + $0xa0] sm:$0xff]
        %v422 = vld [vmem:[#allocation5 + $0xa8] sm:$0xff]
        %v423 = vld [vmem:[#allocation5 + $0xb0] sm:$0xff]
        %v424 = vld [vmem:[#allocation5 + $0xb8] sm:$0xff]
        %v425 = vld [vmem:[#allocation5 + $0xc0] sm:$0xff]
        %v426 = vld [vmem:[#allocation5 + $0xc8] sm:$0xff]
        %v427 = vld [vmem:[#allocation5 + $0xd0] sm:$0xff]
        %v428 = vld [vmem:[#allocation5 + $0xd8] sm:$0xff]
        %v429 = vld [vmem:[#allocation5 + $0xe0] sm:$0xff]
        %v430 = vld [vmem:[#allocation5 + $0xe8] sm:$0xff]
        %v431 = vld [vmem:[#allocation5 + $0xf0] sm:$0xff]
        %v432 = vld [vmem:[#allocation5 + $0xf8] sm:$0xff]
        %v433 = vld [vmem:[%s369] sm:$0x3]
        %v435 = vlaneseq
        %v436 = vshrl.u32 %v435, 7
        %v437 = vsub.s32 0, %v436
        %v438 = vrot.slane %v433, %v437
        %v439 = vlaneseq
        %v440 = vshrl.u32 %v439, 7
        %v441 = vsub.s32 1, %v440
        %v442 = vrot.slane %v433, %v441
        %445 = vmatprep.subr.mxu0 %v402
        %446 = vmatpush1.msra.mxu0 %v401
        %447 = vmatprep.subr.mxu0 %v404
        %448 = vmatpush1.msra.mxu0 %v403
        %449 = vmatprep.subr.mxu0 %v406
        %450 = vmatpush1.msra.mxu0 %v405
        %451 = vmatprep.subr.mxu0 %v408
        %452 = vmatpush1.msra.mxu0 %v407
        %453 = vmatprep.subr.mxu0 %v410
        %454 = vmatpush1.msra.mxu0 %v409
        %455 = vmatprep.subr.mxu0 %v412
        %456 = vmatpush1.msra.mxu0 %v411
        %457 = vmatprep.subr.mxu0 %v414
        %458 = vmatpush1.msra.mxu0 %v413
        %459 = vmatprep.subr.mxu0 %v416
        %460 = vmatpush1.msra.mxu0 %v415
        %461 = vmatprep.subr.mxu0 %v418
        %462 = vmatpush1.msra.mxu0 %v417
        %463 = vmatprep.subr.mxu0 %v420
        %464 = vmatpush1.msra.mxu0 %v419
        %465 = vmatprep.subr.mxu0 %v422
        %466 = vmatpush1.msra.mxu0 %v421
        %467 = vmatprep.subr.mxu0 %v424
        %468 = vmatpush1.msra.mxu0 %v423
        %469 = vmatprep.subr.mxu0 %v426
        %470 = vmatpush1.msra.mxu0 %v425
        %471 = vmatprep.subr.mxu0 %v428
        %472 = vmatpush1.msra.mxu0 %v427
        %473 = vmatprep.subr.mxu0 %v430
        %474 = vmatpush1.msra.mxu0 %v429
        %475 = vmatprep.subr.mxu0 %v432
        %476 = vmatpush1.msra.mxu0 %v431
        %477 = vmatprep.subr.mxu0 0.0
        %478 = vmatpush1.msra.mxu0 0.0
        %479 = vmatprep.subr.mxu0 0.0
        %480 = vmatpush1.msra.mxu0 0.0
        %481 = vmatprep.subr.mxu0 0.0
        %482 = vmatpush1.msra.mxu0 0.0
        %483 = vmatprep.subr.mxu0 0.0
        %484 = vmatpush1.msra.mxu0 0.0
        %485 = vmatprep.subr.mxu0 0.0
        %486 = vmatpush1.msra.mxu0 0.0
        %487 = vmatprep.subr.mxu0 0.0
        %488 = vmatpush1.msra.mxu0 0.0
        %489 = vmatprep.subr.mxu0 0.0
        %490 = vmatpush1.msra.mxu0 0.0
        %491 = vmatprep.subr.mxu0 0.0
        %492 = vmatpush1.msra.mxu0 0.0
        %493 = vmatprep.subr.mxu0 0.0
        %494 = vmatpush1.msra.mxu0 0.0
        %495 = vmatprep.subr.mxu0 0.0
        %496 = vmatpush1.msra.mxu0 0.0
        %497 = vmatprep.subr.mxu0 0.0
        %498 = vmatpush1.msra.mxu0 0.0
        %499 = vmatprep.subr.mxu0 0.0
        %500 = vmatpush1.msra.mxu0 0.0
        %501 = vmatprep.subr.mxu0 0.0
        %502 = vmatpush1.msra.mxu0 0.0
        %503 = vmatprep.subr.mxu0 0.0
        %504 = vmatpush1.msra.mxu0 0.0
        %505 = vmatprep.subr.mxu0 0.0
        %506 = vmatpush1.msra.mxu0 0.0
        %507 = vmatprep.subr.mxu0 0.0
        %508 = vmatpush1.msra.mxu0 0.0
        %509 = vmatprep.mubr.f32.mxu0 0.0
        %510 = vmatmul.mubr.f32.gmra.mrb[0].mxu0 %v400
        %v511 = vpop.f32.mrb[0].mxu0
        %v512 = vadd.f32 %v438, %v511
        %v513 = vpop.f32.mrb[0].mxu0
        %v514 = vadd.f32 %v442, %v513
        %515 = vdwg.mxu0
        %v516 = vmul.f32 %v512, 0.5
        %v517 = vmul.f32 %v514, 0.5
        %v518 = vmul.f32 %v512, 0.70710677
        %v519 = vmul.f32 %v514, 0.70710677
        %v520 = verf.f32.pop %v518
        %v521 = verf.f32.pop %v519
        %v522 = vadd.f32 %v520, 1.0
        %v523 = vadd.f32 %v521, 1.0
        %v524 = vmul.f32 %v516, %v522
        %v525 = vmul.f32 %v517, %v523
        %v526 = vld [vmem:[#allocation7] sm:$0xff]
        %v527 = vld [vmem:[#allocation7 + $0x8] sm:$0xff]
        %v528 = vld [vmem:[#allocation7 + $0x10] sm:$0xff]
        %v529 = vld [vmem:[#allocation7 + $0x18] sm:$0xff]
        %v530 = vld [vmem:[#allocation7 + $0x20] sm:$0xff]
        %v531 = vld [vmem:[#allocation7 + $0x28] sm:$0xff]
        %v532 = vld [vmem:[#allocation7 + $0x30] sm:$0xff]
        %v533 = vld [vmem:[#allocation7 + $0x38] sm:$0xff]
        %v534 = vld [vmem:[#allocation7 + $0x40] sm:$0xff]
        %v535 = vld [vmem:[#allocation7 + $0x48] sm:$0xff]
        %v536 = vld [vmem:[#allocation7 + $0x50] sm:$0xff]
        %v537 = vld [vmem:[#allocation7 + $0x58] sm:$0xff]
        %v538 = vld [vmem:[#allocation7 + $0x60] sm:$0xff]
        %v539 = vld [vmem:[#allocation7 + $0x68] sm:$0xff]
        %v540 = vld [vmem:[#allocation7 + $0x70] sm:$0xff]
        %v541 = vld [vmem:[#allocation7 + $0x78] sm:$0xff]
        %v542 = vld [vmem:[#allocation7 + $0x80] sm:$0xff]
        %v543 = vld [vmem:[#allocation7 + $0x88] sm:$0xff]
        %v544 = vld [vmem:[#allocation7 + $0x90] sm:$0xff]
        %v545 = vld [vmem:[#allocation7 + $0x98] sm:$0xff]
        %v546 = vld [vmem:[#allocation7 + $0xa0] sm:$0xff]
        %v547 = vld [vmem:[#allocation7 + $0xa8] sm:$0xff]
        %v548 = vld [vmem:[#allocation7 + $0xb0] sm:$0xff]
        %v549 = vld [vmem:[#allocation7 + $0xb8] sm:$0xff]
        %v550 = vld [vmem:[#allocation7 + $0xc0] sm:$0xff]
        %v551 = vld [vmem:[#allocation7 + $0xc8] sm:$0xff]
        %v552 = vld [vmem:[#allocation7 + $0xd0] sm:$0xff]
        %v553 = vld [vmem:[#allocation7 + $0xd8] sm:$0xff]
        %v554 = vld [vmem:[#allocation7 + $0xe0] sm:$0xff]
        %v555 = vld [vmem:[#allocation7 + $0xe8] sm:$0xff]
        %v556 = vld [vmem:[#allocation7 + $0xf0] sm:$0xff]
        %v557 = vld [vmem:[#allocation7 + $0xf8] sm:$0xff]
        %v558 = vld [vmem:[%s6] sm:$0x1]
        %v560 = vlaneseq
        %v561 = vshrl.u32 %v560, 7
        %v562 = vsub.s32 0, %v561
        %v563 = vrot.slane %v558, %v562
        %565 = vmatprep.subr.mxu0 0.0
        %566 = vmatpush1.msra.mxu0 %v526
        %567 = vmatprep.subr.mxu0 0.0
        %568 = vmatpush1.msra.mxu0 %v527
        %569 = vmatprep.subr.mxu0 0.0
        %570 = vmatpush1.msra.mxu0 %v528
        %571 = vmatprep.subr.mxu0 0.0
        %572 = vmatpush1.msra.mxu0 %v529
        %573 = vmatprep.subr.mxu0 0.0
        %574 = vmatpush1.msra.mxu0 %v530
        %575 = vmatprep.subr.mxu0 0.0
        %576 = vmatpush1.msra.mxu0 %v531
        %577 = vmatprep.subr.mxu0 0.0
        %578 = vmatpush1.msra.mxu0 %v532
        %579 = vmatprep.subr.mxu0 0.0
        %580 = vmatpush1.msra.mxu0 %v533
        %581 = vmatprep.subr.mxu0 0.0
        %582 = vmatpush1.msra.mxu0 %v534
        %583 = vmatprep.subr.mxu0 0.0
        %584 = vmatpush1.msra.mxu0 %v535
        %585 = vmatprep.subr.mxu0 0.0
        %586 = vmatpush1.msra.mxu0 %v536
        %587 = vmatprep.subr.mxu0 0.0
        %588 = vmatpush1.msra.mxu0 %v537
        %589 = vmatprep.subr.mxu0 0.0
        %590 = vmatpush1.msra.mxu0 %v538
        %591 = vmatprep.subr.mxu0 0.0
        %592 = vmatpush1.msra.mxu0 %v539
        %593 = vmatprep.subr.mxu0 0.0
        %594 = vmatpush1.msra.mxu0 %v540
        %595 = vmatprep.subr.mxu0 0.0
        %596 = vmatpush1.msra.mxu0 %v541
        %597 = vmatprep.subr.mxu0 0.0
        %598 = vmatpush1.msra.mxu0 %v542
        %599 = vmatprep.subr.mxu0 0.0
        %600 = vmatpush1.msra.mxu0 %v543
        %601 = vmatprep.subr.mxu0 0.0
        %602 = vmatpush1.msra.mxu0 %v544
        %603 = vmatprep.subr.mxu0 0.0
        %604 = vmatpush1.msra.mxu0 %v545
        %605 = vmatprep.subr.mxu0 0.0
        %606 = vmatpush1.msra.mxu0 %v546
        %607 = vmatprep.subr.mxu0 0.0
        %608 = vmatpush1.msra.mxu0 %v547
        %609 = vmatprep.subr.mxu0 0.0
        %610 = vmatpush1.msra.mxu0 %v548
        %611 = vmatprep.subr.mxu0 0.0
        %612 = vmatpush1.msra.mxu0 %v549
        %613 = vmatprep.subr.mxu0 0.0
        %614 = vmatpush1.msra.mxu0 %v550
        %615 = vmatprep.subr.mxu0 0.0
        %616 = vmatpush1.msra.mxu0 %v551
        %617 = vmatprep.subr.mxu0 0.0
        %618 = vmatpush1.msra.mxu0 %v552
        %619 = vmatprep.subr.mxu0 0.0
        %620 = vmatpush1.msra.mxu0 %v553
        %621 = vmatprep.subr.mxu0 0.0
        %622 = vmatpush1.msra.mxu0 %v554
        %623 = vmatprep.subr.mxu0 0.0
        %624 = vmatpush1.msra.mxu0 %v555
        %625 = vmatprep.subr.mxu0 0.0
        %626 = vmatpush1.msra.mxu0 %v556
        %627 = vmatprep.subr.mxu0 0.0
        %628 = vmatpush1.msra.mxu0 %v557
        %629 = vmatprep.mubr.f32.mxu0 %v525
        %630 = vmatmul.mubr.f32.gmra.mrb[0].mxu0 %v524
        %v631 = vpop.f32.mrb[0].mxu0
        %v632 = vadd.f32 %v563, %v631
        %v633 = vpop.f32.mrb[0].mxu0
        %634 = vdwg.mxu0
        %635 = vst [vmem:[%s364] sm:$0xff] %v632
        %s636 = sand.u32 %s212, 1
        %s637 = scalar_lea.sflag [#allocation4], %s636
        %s638 = sand.u32 %s212, 1
        %s639 = smul.addr %s638, 8
        %s640 = scalar_lea.vmem [#allocation8], %s639
        // Predicated region
        $region61: #{tpu_custom_call.1} parent=47 // pred_check
          %p641 = pneg %p222
        $region62: #{tpu_custom_call.1} parent=47 // pred_check_branch
          %643 = sbr.rel (%p641) target = $region64
        $region63: #{tpu_custom_call.1} parent=47 // pred_region
          %s645 = ssub.s32 128, 128
          %646 = vsyncadd %s637, %s645
          %s647 = smul.addr %s29, 128
          %s648 = scalar_lea.hbm %s7, %s647
          %s650 = sshll.u32 %s640, 4
          %s651 = int_to_ptr.vmem [resolvable:$true] %s650
          %653 = dma.vmem_to_hbm [thread:$0]  %s651, 128, %s648, %s637
        $region64: #{tpu_custom_call.1} parent=47 // pred_fallthru
          _
      $region48: #{tpu_custom_call.1} parent=5 // pred_fallthru
        _
      %p654 = scmp.le.s32.totalorder 2, %s20
      // Predicated region
      $region65: #{tpu_custom_call.1} parent=5 // pred_check
        %p655 = pneg %p654
      $region66: #{tpu_custom_call.1} parent=5 // pred_check_branch
        %657 = sbr.rel (%p655) target = $region68
      $region67: #{tpu_custom_call.1} parent=5 // pred_region
        %s658 = ssub.s32 %s20, 2
        // Predicated region
        $region69: #{tpu_custom_call.1} parent=67 // pred_check
          %p659 = pneg %p228
        $region70: #{tpu_custom_call.1} parent=67 // pred_check_branch
          %661 = sbr.rel (%p659) target = $region72
        $region71: #{tpu_custom_call.1} parent=67 // pred_region
          %s662 = sand.u32 %s213, 1
          %s663 = scalar_lea.sflag [#allocation4], %s662
          %s664 = sand.u32 %s213, 1
          %s665 = smul.addr %s664, 8
          %s666 = scalar_lea.vmem [#allocation8], %s665
          %667 = dma.done %s663, 128
        $region72: #{tpu_custom_call.1} parent=67 // pred_fallthru
          _
      $region68: #{tpu_custom_call.1} parent=5 // pred_fallthru
        _
    $region6: #{tpu_custom_call.1} parent=1 // loop_footer
      %s24 = sadd.s32 1, %s20
    $region7: #{tpu_custom_call.1} parent=1 // loop_footer_branch
      %19 = sbr.rel target = $region3
    $region8: #{tpu_custom_call.1} parent=1 // loop_exit
      _
    %668 = vsyncpa [#allocation3], 1
    %s669 = scalar_lea.sflag [#allocation3], 1
    %670 = vsyncpa %s669, 1
    %671 = vsyncpa [#allocation6], 1
    %672 = vsyncpa [#allocation4], 1
    %s673 = scalar_lea.sflag [#allocation4], 1
    %674 = vsyncpa %s673, 1

</llo_original>
